<compile_context>
chip_gen: v6e
topology: v6e:2x2x1
jax: 0.10.0
libtpu: 0.0.40
codegen_flags: <defaults>
</compile_context>

<pallas_src>
import functools

import numpy as np
import jax
import jax.numpy as jnp
from jax.experimental import pallas as pl
from jax.experimental.pallas import tpu as pltpu


# ----------------------------------------------------------------------------
# Fused forward kernel
# ----------------------------------------------------------------------------
def _stage_forward_kernel(x_ref, b1w_ref, b1b_ref, b2w_ref, b2b_ref,
                          b3w_ref, b3b_ref, wfc1_ref, bfc1_ref,
                          wfc2_ref, bfc2_ref, o_ref, flat_ref,
                          *, BT, K, hC, H1, H2, H3, W3):
    def conv_relu(act, Hout, wband_ref, brow_ref):
        # act: (Hin*BT, Cin*Win) slab, rows ordered (h, n); band: (K, Cin*Win, Cout*Wout).
        cols = wband_ref.shape[-1]
        acc = jnp.zeros((Hout * BT, cols), jnp.float32)
        for kh in range(K):                       # K sublane-aligned row slices, K MXU pushes
            rows = act[kh * BT:(kh + Hout) * BT, :]
            acc = acc + jnp.dot(rows, wband_ref[kh],
                                preferred_element_type=jnp.float32)
        return jnp.maximum(acc + brow_ref[...], 0.0)

    # conv1 -> conv2 -> conv2 again (the PyTorch forward() reuses conv2).
    a1 = conv_relu(x_ref[0], H1, b1w_ref, b1b_ref)
    a2 = conv_relu(a1, H2, b2w_ref, b2b_ref)
    a3 = conv_relu(a2, H3, b3w_ref, b3b_ref)

    # Assemble c3 into a single (BT, dense) slab in torch's (c, h, w) flatten
    # order, then do fc1 as ONE matmul (single MXU push instead of 8 tiny ones).
    for c in range(hC):
        for h in range(H3):
            flat_ref[:, (c * H3 + h) * W3:(c * H3 + h + 1) * W3] = \
                a3[h * BT:(h + 1) * BT, c * W3:(c + 1) * W3]
    flat = flat_ref[...]

    h1 = jnp.maximum(
        jnp.dot(flat, wfc1_ref[...], preferred_element_type=jnp.float32)
        + bfc1_ref[...], 0.0)
    out = jnp.dot(h1, wfc2_ref[...], preferred_element_type=jnp.float32) + bfc2_ref[...]
    o_ref[0] = out.astype(o_ref.dtype)            # lane-dense (BT, 128) store


# ----------------------------------------------------------------------------
# Parameters (PyTorch layouts) and one-time packing into kernel layouts
# ----------------------------------------------------------------------------
def init_params(key, inH, inW, inC, outD, hC=2, csize=5):
    H3 = inH - 3 * (csize - 1)
    W3 = inW - 3 * (csize - 1)
    dense = H3 * W3 * hC
    ks = jax.random.split(key, 10)

    def w(k, shape, fan_in):
        return jax.random.normal(k, shape, jnp.float32) * (1.0 / jnp.sqrt(fan_in))

    return {
        "conv1_w": w(ks[0], (hC, inC, csize, csize), inC * csize * csize),
        "conv1_b": w(ks[1], (hC,), inC * csize * csize),
        "conv2_w": w(ks[2], (hC, hC, csize, csize), hC * csize * csize),
        "conv2_b": w(ks[3], (hC,), hC * csize * csize),
        # conv3 exists in __init__ but forward() never uses it; kept for fidelity.
        "conv3_w": w(ks[4], (hC, hC, csize, csize), hC * csize * csize),
        "conv3_b": w(ks[5], (hC,), hC * csize * csize),
        "fc1_w": w(ks[6], (dense, dense), dense),   # PyTorch Linear layout: (out, in)
        "fc1_b": w(ks[7], (dense,), dense),
        "fc2_w": w(ks[8], (outD, dense), dense),
        "fc2_b": w(ks[9], (outD,), dense),
    }


def pack_params(params, inH, inW, inC, outD, hC=2, csize=5):
    """One-time repack into kernel-friendly layouts (no per-call transposes)."""
    H1, W1 = inH - csize + 1, inW - csize + 1
    H2, W2 = H1 - csize + 1, W1 - csize + 1
    H3, W3 = H2 - csize + 1, W2 - csize + 1
    dense = hC * H3 * W3
    OUTP = ((outD + 127) // 128) * 128            # lane-dense padded output width

    def band(w, Win, Wout):
        # (Cout, Cin, K, K) conv weight -> K banded matrices (Cin*Win, Cout*Wout).
        w = np.asarray(w)
        Cout, Cin, K, _ = w.shape
        B = np.zeros((K, Cin * Win, Cout * Wout), np.float32)
        for kh in range(K):
            for co in range(Cout):
                for ci in range(Cin):
                    for wo in range(Wout):
                        B[kh, ci * Win + wo:ci * Win + wo + K, co * Wout + wo] = w[co, ci, kh, :]
        return jnp.asarray(B)

    wfc2 = np.zeros((dense, OUTP), np.float32)
    wfc2[:, :outD] = np.asarray(params["fc2_w"]).T
    bfc2 = np.zeros((1, OUTP), np.float32)
    bfc2[0, :outD] = np.asarray(params["fc2_b"])

    return {
        "b1w": band(params["conv1_w"], inW, W1),
        "b1b": jnp.repeat(params["conv1_b"], W1)[None, :],
        "b2w": band(params["conv2_w"], W1, W2),
        "b2b": jnp.repeat(params["conv2_b"], W2)[None, :],
        # forward() applies conv2 twice; second application re-embedded at W2->W3.
        "b3w": band(params["conv2_w"], W2, W3),
        "b3b": jnp.repeat(params["conv2_b"], W3)[None, :],
        # TODO(synk): cast to bf16 at realistic dense (MXU-native, halves weight bytes).
        "wfc1": params["fc1_w"].T,                 # (in, out); rows already (c,h,w) order
        "bfc1": params["fc1_b"][None, :],
        "wfc2": jnp.asarray(wfc2),                 # (dense, OUTP) zero-padded columns
        "bfc2": jnp.asarray(bfc2),
    }


# ----------------------------------------------------------------------------
# Forward wrapper (single pallas_call, batch-tiled grid)
# ----------------------------------------------------------------------------
def make_stage_forward(inH, inW, inC, outD, hC=2, csize=5, batch_tile=8):
    H1, W1 = inH - csize + 1, inW - csize + 1
    H2, W2 = H1 - csize + 1, W1 - csize + 1
    H3, W3 = H2 - csize + 1, W2 - csize + 1
    dense = hC * H3 * W3
    OUTP = ((outD + 127) // 128) * 128
    BT = batch_tile                                # samples per grid step (sublane-aligned)

    kernel = functools.partial(_stage_forward_kernel, BT=BT, K=csize, hC=hC,
                               H1=H1, H2=H2, H3=H3, W3=W3)

    def full_spec(shape):
        nd = len(shape)
        return pl.BlockSpec(shape, lambda b, _nd=nd: (0,) * _nd)

    def forward(packed, x):
        N = x.shape[0]
        num_tiles = pl.cdiv(N, BT)
        NPAD = num_tiles * BT
        # Relayout NCHW -> (tile, rows=(h, n), cols=(c, w)); each h row-group is
        # padded to BT=8 samples so every kh slice in the kernel is 8-aligned.
        xp = jnp.pad(x, ((0, NPAD - N), (0, 0), (0, 0), (0, 0)))
        xp = xp.reshape(num_tiles, BT, inC, inH, inW)
        xp = jnp.transpose(xp, (0, 3, 1, 2, 4)).reshape(num_tiles, inH * BT, inC * inW)

        weights = (packed["b1w"], packed["b1b"], packed["b2w"], packed["b2b"],
                   packed["b3w"], packed["b3b"], packed["wfc1"], packed["bfc1"],
                   packed["wfc2"], packed["bfc2"])

        conv_flops = 2 * (csize * H1 * BT * (inC * inW) * (hC * W1)
                          + csize * H2 * BT * (hC * W1) * (hC * W2)
                          + csize * H3 * BT * (hC * W2) * (hC * W3))
        fc_flops = 2 * BT * dense * dense + 2 * BT * dense * OUTP
        flops = num_tiles * (conv_flops + fc_flops)
        param_bytes = 4 * sum(int(w.size) for w in weights)
        bytes_accessed = int(4 * xp.size + num_tiles * param_bytes
                             + 4 * num_tiles * BT * OUTP)

        out = pl.pallas_call(
            kernel,
            out_shape=jax.ShapeDtypeStruct((num_tiles, BT, OUTP), jnp.float32),
            grid=(num_tiles,),
            in_specs=[pl.BlockSpec((1, inH * BT, inC * inW), lambda b: (b, 0, 0))]
                     + [full_spec(w.shape) for w in weights],
            out_specs=pl.BlockSpec((1, BT, OUTP), lambda b: (b, 0, 0)),
            scratch_shapes=[pltpu.VMEM((BT, dense), jnp.float32)],
            compiler_params=pltpu.CompilerParams(
                dimension_semantics=("parallel",),          # megacore on v7x
                vmem_limit_bytes=32 * 1024 * 1024),          # fits v5e/v6e/v7x scoped VMEM
            cost_estimate=pl.CostEstimate(
                flops=int(flops), transcendentals=0,
                bytes_accessed=bytes_accessed),
        )(xp, *weights)
        return out.reshape(NPAD, OUTP)[:N, :outD]

    return jax.jit(forward)


# ----------------------------------------------------------------------------
# Pure-JAX reference (correctness checking only; forced to true-f32 precision)
# ----------------------------------------------------------------------------
def reference_forward(params, x):
    prec = jax.lax.Precision.HIGHEST

    def conv(inp, w, b):
        y = jax.lax.conv_general_dilated(
            inp, w, window_strides=(1, 1), padding="VALID",
            dimension_numbers=("NCHW", "OIHW", "NCHW"), precision=prec)
        return y + b[None, :, None, None]

    c1 = jnp.maximum(conv(x, params["conv1_w"], params["conv1_b"]), 0.0)
    c2 = jnp.maximum(conv(c1, params["conv2_w"], params["conv2_b"]), 0.0)
    c3 = jnp.maximum(conv(c2, params["conv2_w"], params["conv2_b"]), 0.0)   # conv2 twice
    flat = c3.reshape(c3.shape[0], -1)
    h1 = jnp.maximum(jnp.dot(flat, params["fc1_w"].T, precision=prec) + params["fc1_b"], 0.0)
    return jnp.dot(h1, params["fc2_w"].T, precision=prec) + params["fc2_b"]


if __name__ == "__main__":
    batch, inC, inH, inW = 2, 4, 16, 16
    outD, hC, csize = 3, 2, 5

    key = jax.random.PRNGKey(0)
    pkey, xkey = jax.random.split(key)
    params = init_params(pkey, inH, inW, inC, outD, hC, csize)
    packed = pack_params(params, inH, inW, inC, outD, hC, csize)
    x = jax.random.normal(xkey, (batch, inC, inH, inW), jnp.float32)

    forward = make_stage_forward(inH, inW, inC, outD, hC, csize)
    y = jax.block_until_ready(forward(packed, x))
    assert y.shape == (batch, outD), y.shape

    y_ref = reference_forward(params, x)
    err = float(jnp.max(jnp.abs(y - y_ref)))
    # Tolerance accounts for MXU f32 pass-decomposition / accumulation-order
    # differences across the 5 chained matmul stages vs the XLA reference.
    assert err < 1e-2, f"mismatch vs reference: max abs err = {err}"

    print("KERNEL_OK")
</pallas_src>

<mosaic_0001>
module attributes {stable_mosaic.version = 11 : i64} {
  func.func @_stage_forward_kernel(%arg0: i32, %arg1: memref<1x128x64xf32, #tpu.memory_space<vmem>>, %arg2: memref<5x64x24xf32, #tpu.memory_space<vmem>>, %arg3: memref<1x24xf32, #tpu.memory_space<vmem>>, %arg4: memref<5x24x16xf32, #tpu.memory_space<vmem>>, %arg5: memref<1x16xf32, #tpu.memory_space<vmem>>, %arg6: memref<5x16x8xf32, #tpu.memory_space<vmem>>, %arg7: memref<1x8xf32, #tpu.memory_space<vmem>>, %arg8: memref<32x32xf32, #tpu.memory_space<vmem>>, %arg9: memref<1x32xf32, #tpu.memory_space<vmem>>, %arg10: memref<32x128xf32, #tpu.memory_space<vmem>>, %arg11: memref<1x128xf32, #tpu.memory_space<vmem>>, %arg12: memref<1x8x128xf32, #tpu.memory_space<vmem>>, %arg13: memref<8x32xf32, #tpu.memory_space<vmem>>) attributes {dimension_semantics = [#tpu.dimension_semantics<parallel>], iteration_bounds = array<i64: 1>, scalar_prefetch = 0 : i64, scratch_operands = 1 : i64, tpu.core_type = #tpu.core_type<tc>, window_params = [{transform_indices = @transform_0, window_bounds = array<i64: 1, 128, 64>}, {pipeline_mode = #tpu.pipeline_mode<synchronous>, transform_indices = @transform_1, window_bounds = array<i64: 5, 64, 24>}, {pipeline_mode = #tpu.pipeline_mode<synchronous>, transform_indices = @transform_2, window_bounds = array<i64: 1, 24>}, {pipeline_mode = #tpu.pipeline_mode<synchronous>, transform_indices = @transform_3, window_bounds = array<i64: 5, 24, 16>}, {pipeline_mode = #tpu.pipeline_mode<synchronous>, transform_indices = @transform_4, window_bounds = array<i64: 1, 16>}, {pipeline_mode = #tpu.pipeline_mode<synchronous>, transform_indices = @transform_5, window_bounds = array<i64: 5, 16, 8>}, {pipeline_mode = #tpu.pipeline_mode<synchronous>, transform_indices = @transform_6, window_bounds = array<i64: 1, 8>}, {pipeline_mode = #tpu.pipeline_mode<synchronous>, transform_indices = @transform_7, window_bounds = array<i64: 32, 32>}, {pipeline_mode = #tpu.pipeline_mode<synchronous>, transform_indices = @transform_8, window_bounds = array<i64: 1, 32>}, {pipeline_mode = #tpu.pipeline_mode<synchronous>, transform_indices = @transform_9, window_bounds = array<i64: 32, 128>}, {pipeline_mode = #tpu.pipeline_mode<synchronous>, transform_indices = @transform_10, window_bounds = array<i64: 1, 128>}, {transform_indices = @transform_11, window_bounds = array<i64: 1, 8, 128>}]} {
    %c0 = arith.constant 0 : index
    %c0_0 = arith.constant 0 : index
    %c0_1 = arith.constant 0 : index
    %0 = vector.load %arg1[%c0, %c0_0, %c0_1] : memref<1x128x64xf32, #tpu.memory_space<vmem>>, vector<1x128x64xf32>
    %1 = vector.shape_cast %0 : vector<1x128x64xf32> to vector<128x64xf32>
    %cst = arith.constant 0.000000e+00 : f32
    %2 = vector.broadcast %cst : f32 to vector<96x24xf32>
    %3 = vector.extract_strided_slice %1 {offsets = [0, 0], sizes = [96, 64], strides = [1, 1]} : vector<128x64xf32> to vector<96x64xf32>
    %c0_2 = arith.constant 0 : index
    %c0_3 = arith.constant 0 : index
    %c0_4 = arith.constant 0 : index
    %4 = vector.load %arg2[%c0_2, %c0_3, %c0_4] : memref<5x64x24xf32, #tpu.memory_space<vmem>>, vector<1x64x24xf32>
    %5 = vector.shape_cast %4 : vector<1x64x24xf32> to vector<64x24xf32>
    %cst_5 = arith.constant dense<0.000000e+00> : vector<96x24xf32>
    %6 = tpu.matmul %3, %5, %cst_5 {dimension_numbers = #tpu.dot_dimension_numbers<[1], [0], [0], [1], [0, 0, 1, 1], [], []>} : vector<96x64xf32>, vector<64x24xf32>, vector<96x24xf32> -> vector<96x24xf32>
    %7 = arith.addf %2, %6 : vector<96x24xf32>
    %8 = vector.extract_strided_slice %1 {offsets = [8, 0], sizes = [96, 64], strides = [1, 1]} : vector<128x64xf32> to vector<96x64xf32>
    %c1 = arith.constant 1 : index
    %c0_6 = arith.constant 0 : index
    %c0_7 = arith.constant 0 : index
    %9 = vector.load %arg2[%c1, %c0_6, %c0_7] : memref<5x64x24xf32, #tpu.memory_space<vmem>>, vector<1x64x24xf32>
    %10 = vector.shape_cast %9 : vector<1x64x24xf32> to vector<64x24xf32>
    %cst_8 = arith.constant dense<0.000000e+00> : vector<96x24xf32>
    %11 = tpu.matmul %8, %10, %cst_8 {dimension_numbers = #tpu.dot_dimension_numbers<[1], [0], [0], [1], [0, 0, 1, 1], [], []>} : vector<96x64xf32>, vector<64x24xf32>, vector<96x24xf32> -> vector<96x24xf32>
    %12 = arith.addf %7, %11 : vector<96x24xf32>
    %13 = vector.extract_strided_slice %1 {offsets = [16, 0], sizes = [96, 64], strides = [1, 1]} : vector<128x64xf32> to vector<96x64xf32>
    %c2 = arith.constant 2 : index
    %c0_9 = arith.constant 0 : index
    %c0_10 = arith.constant 0 : index
    %14 = vector.load %arg2[%c2, %c0_9, %c0_10] : memref<5x64x24xf32, #tpu.memory_space<vmem>>, vector<1x64x24xf32>
    %15 = vector.shape_cast %14 : vector<1x64x24xf32> to vector<64x24xf32>
    %cst_11 = arith.constant dense<0.000000e+00> : vector<96x24xf32>
    %16 = tpu.matmul %13, %15, %cst_11 {dimension_numbers = #tpu.dot_dimension_numbers<[1], [0], [0], [1], [0, 0, 1, 1], [], []>} : vector<96x64xf32>, vector<64x24xf32>, vector<96x24xf32> -> vector<96x24xf32>
    %17 = arith.addf %12, %16 : vector<96x24xf32>
    %18 = vector.extract_strided_slice %1 {offsets = [24, 0], sizes = [96, 64], strides = [1, 1]} : vector<128x64xf32> to vector<96x64xf32>
    %c3 = arith.constant 3 : index
    %c0_12 = arith.constant 0 : index
    %c0_13 = arith.constant 0 : index
    %19 = vector.load %arg2[%c3, %c0_12, %c0_13] : memref<5x64x24xf32, #tpu.memory_space<vmem>>, vector<1x64x24xf32>
    %20 = vector.shape_cast %19 : vector<1x64x24xf32> to vector<64x24xf32>
    %cst_14 = arith.constant dense<0.000000e+00> : vector<96x24xf32>
    %21 = tpu.matmul %18, %20, %cst_14 {dimension_numbers = #tpu.dot_dimension_numbers<[1], [0], [0], [1], [0, 0, 1, 1], [], []>} : vector<96x64xf32>, vector<64x24xf32>, vector<96x24xf32> -> vector<96x24xf32>
    %22 = arith.addf %17, %21 : vector<96x24xf32>
    %23 = vector.extract_strided_slice %1 {offsets = [32, 0], sizes = [96, 64], strides = [1, 1]} : vector<128x64xf32> to vector<96x64xf32>
    %c4 = arith.constant 4 : index
    %c0_15 = arith.constant 0 : index
    %c0_16 = arith.constant 0 : index
    %24 = vector.load %arg2[%c4, %c0_15, %c0_16] : memref<5x64x24xf32, #tpu.memory_space<vmem>>, vector<1x64x24xf32>
    %25 = vector.shape_cast %24 : vector<1x64x24xf32> to vector<64x24xf32>
    %cst_17 = arith.constant dense<0.000000e+00> : vector<96x24xf32>
    %26 = tpu.matmul %23, %25, %cst_17 {dimension_numbers = #tpu.dot_dimension_numbers<[1], [0], [0], [1], [0, 0, 1, 1], [], []>} : vector<96x64xf32>, vector<64x24xf32>, vector<96x24xf32> -> vector<96x24xf32>
    %27 = arith.addf %22, %26 : vector<96x24xf32>
    %c0_18 = arith.constant 0 : index
    %c0_19 = arith.constant 0 : index
    %28 = vector.load %arg3[%c0_18, %c0_19] : memref<1x24xf32, #tpu.memory_space<vmem>>, vector<1x24xf32>
    %29 = vector.broadcast %28 : vector<1x24xf32> to vector<96x24xf32>
    %30 = arith.addf %27, %29 : vector<96x24xf32>
    %cst_20 = arith.constant 0.000000e+00 : f32
    %31 = vector.broadcast %cst_20 : f32 to vector<96x24xf32>
    %32 = arith.maximumf %30, %31 : vector<96x24xf32>
    %cst_21 = arith.constant 0.000000e+00 : f32
    %33 = vector.broadcast %cst_21 : f32 to vector<64x16xf32>
    %34 = vector.extract_strided_slice %32 {offsets = [0, 0], sizes = [64, 24], strides = [1, 1]} : vector<96x24xf32> to vector<64x24xf32>
    %c0_22 = arith.constant 0 : index
    %c0_23 = arith.constant 0 : index
    %c0_24 = arith.constant 0 : index
    %35 = vector.load %arg4[%c0_22, %c0_23, %c0_24] : memref<5x24x16xf32, #tpu.memory_space<vmem>>, vector<1x24x16xf32>
    %36 = vector.shape_cast %35 : vector<1x24x16xf32> to vector<24x16xf32>
    %cst_25 = arith.constant dense<0.000000e+00> : vector<64x16xf32>
    %37 = tpu.matmul %34, %36, %cst_25 {dimension_numbers = #tpu.dot_dimension_numbers<[1], [0], [0], [1], [0, 0, 1, 1], [], []>} : vector<64x24xf32>, vector<24x16xf32>, vector<64x16xf32> -> vector<64x16xf32>
    %38 = arith.addf %33, %37 : vector<64x16xf32>
    %39 = vector.extract_strided_slice %32 {offsets = [8, 0], sizes = [64, 24], strides = [1, 1]} : vector<96x24xf32> to vector<64x24xf32>
    %c1_26 = arith.constant 1 : index
    %c0_27 = arith.constant 0 : index
    %c0_28 = arith.constant 0 : index
    %40 = vector.load %arg4[%c1_26, %c0_27, %c0_28] : memref<5x24x16xf32, #tpu.memory_space<vmem>>, vector<1x24x16xf32>
    %41 = vector.shape_cast %40 : vector<1x24x16xf32> to vector<24x16xf32>
    %cst_29 = arith.constant dense<0.000000e+00> : vector<64x16xf32>
    %42 = tpu.matmul %39, %41, %cst_29 {dimension_numbers = #tpu.dot_dimension_numbers<[1], [0], [0], [1], [0, 0, 1, 1], [], []>} : vector<64x24xf32>, vector<24x16xf32>, vector<64x16xf32> -> vector<64x16xf32>
    %43 = arith.addf %38, %42 : vector<64x16xf32>
    %44 = vector.extract_strided_slice %32 {offsets = [16, 0], sizes = [64, 24], strides = [1, 1]} : vector<96x24xf32> to vector<64x24xf32>
    %c2_30 = arith.constant 2 : index
    %c0_31 = arith.constant 0 : index
    %c0_32 = arith.constant 0 : index
    %45 = vector.load %arg4[%c2_30, %c0_31, %c0_32] : memref<5x24x16xf32, #tpu.memory_space<vmem>>, vector<1x24x16xf32>
    %46 = vector.shape_cast %45 : vector<1x24x16xf32> to vector<24x16xf32>
    %cst_33 = arith.constant dense<0.000000e+00> : vector<64x16xf32>
    %47 = tpu.matmul %44, %46, %cst_33 {dimension_numbers = #tpu.dot_dimension_numbers<[1], [0], [0], [1], [0, 0, 1, 1], [], []>} : vector<64x24xf32>, vector<24x16xf32>, vector<64x16xf32> -> vector<64x16xf32>
    %48 = arith.addf %43, %47 : vector<64x16xf32>
    %49 = vector.extract_strided_slice %32 {offsets = [24, 0], sizes = [64, 24], strides = [1, 1]} : vector<96x24xf32> to vector<64x24xf32>
    %c3_34 = arith.constant 3 : index
    %c0_35 = arith.constant 0 : index
    %c0_36 = arith.constant 0 : index
    %50 = vector.load %arg4[%c3_34, %c0_35, %c0_36] : memref<5x24x16xf32, #tpu.memory_space<vmem>>, vector<1x24x16xf32>
    %51 = vector.shape_cast %50 : vector<1x24x16xf32> to vector<24x16xf32>
    %cst_37 = arith.constant dense<0.000000e+00> : vector<64x16xf32>
    %52 = tpu.matmul %49, %51, %cst_37 {dimension_numbers = #tpu.dot_dimension_numbers<[1], [0], [0], [1], [0, 0, 1, 1], [], []>} : vector<64x24xf32>, vector<24x16xf32>, vector<64x16xf32> -> vector<64x16xf32>
    %53 = arith.addf %48, %52 : vector<64x16xf32>
    %54 = vector.extract_strided_slice %32 {offsets = [32, 0], sizes = [64, 24], strides = [1, 1]} : vector<96x24xf32> to vector<64x24xf32>
    %c4_38 = arith.constant 4 : index
    %c0_39 = arith.constant 0 : index
    %c0_40 = arith.constant 0 : index
    %55 = vector.load %arg4[%c4_38, %c0_39, %c0_40] : memref<5x24x16xf32, #tpu.memory_space<vmem>>, vector<1x24x16xf32>
    %56 = vector.shape_cast %55 : vector<1x24x16xf32> to vector<24x16xf32>
    %cst_41 = arith.constant dense<0.000000e+00> : vector<64x16xf32>
    %57 = tpu.matmul %54, %56, %cst_41 {dimension_numbers = #tpu.dot_dimension_numbers<[1], [0], [0], [1], [0, 0, 1, 1], [], []>} : vector<64x24xf32>, vector<24x16xf32>, vector<64x16xf32> -> vector<64x16xf32>
    %58 = arith.addf %53, %57 : vector<64x16xf32>
    %c0_42 = arith.constant 0 : index
    %c0_43 = arith.constant 0 : index
    %59 = vector.load %arg5[%c0_42, %c0_43] : memref<1x16xf32, #tpu.memory_space<vmem>>, vector<1x16xf32>
    %60 = vector.broadcast %59 : vector<1x16xf32> to vector<64x16xf32>
    %61 = arith.addf %58, %60 : vector<64x16xf32>
    %cst_44 = arith.constant 0.000000e+00 : f32
    %62 = vector.broadcast %cst_44 : f32 to vector<64x16xf32>
    %63 = arith.maximumf %61, %62 : vector<64x16xf32>
    %cst_45 = arith.constant 0.000000e+00 : f32
    %64 = vector.broadcast %cst_45 : f32 to vector<32x8xf32>
    %65 = vector.extract_strided_slice %63 {offsets = [0, 0], sizes = [32, 16], strides = [1, 1]} : vector<64x16xf32> to vector<32x16xf32>
    %c0_46 = arith.constant 0 : index
    %c0_47 = arith.constant 0 : index
    %c0_48 = arith.constant 0 : index
    %66 = vector.load %arg6[%c0_46, %c0_47, %c0_48] : memref<5x16x8xf32, #tpu.memory_space<vmem>>, vector<1x16x8xf32>
    %67 = vector.shape_cast %66 : vector<1x16x8xf32> to vector<16x8xf32>
    %cst_49 = arith.constant dense<0.000000e+00> : vector<32x8xf32>
    %68 = tpu.matmul %65, %67, %cst_49 {dimension_numbers = #tpu.dot_dimension_numbers<[1], [0], [0], [1], [0, 0, 1, 1], [], []>} : vector<32x16xf32>, vector<16x8xf32>, vector<32x8xf32> -> vector<32x8xf32>
    %69 = arith.addf %64, %68 : vector<32x8xf32>
    %70 = vector.extract_strided_slice %63 {offsets = [8, 0], sizes = [32, 16], strides = [1, 1]} : vector<64x16xf32> to vector<32x16xf32>
    %c1_50 = arith.constant 1 : index
    %c0_51 = arith.constant 0 : index
    %c0_52 = arith.constant 0 : index
    %71 = vector.load %arg6[%c1_50, %c0_51, %c0_52] : memref<5x16x8xf32, #tpu.memory_space<vmem>>, vector<1x16x8xf32>
    %72 = vector.shape_cast %71 : vector<1x16x8xf32> to vector<16x8xf32>
    %cst_53 = arith.constant dense<0.000000e+00> : vector<32x8xf32>
    %73 = tpu.matmul %70, %72, %cst_53 {dimension_numbers = #tpu.dot_dimension_numbers<[1], [0], [0], [1], [0, 0, 1, 1], [], []>} : vector<32x16xf32>, vector<16x8xf32>, vector<32x8xf32> -> vector<32x8xf32>
    %74 = arith.addf %69, %73 : vector<32x8xf32>
    %75 = vector.extract_strided_slice %63 {offsets = [16, 0], sizes = [32, 16], strides = [1, 1]} : vector<64x16xf32> to vector<32x16xf32>
    %c2_54 = arith.constant 2 : index
    %c0_55 = arith.constant 0 : index
    %c0_56 = arith.constant 0 : index
    %76 = vector.load %arg6[%c2_54, %c0_55, %c0_56] : memref<5x16x8xf32, #tpu.memory_space<vmem>>, vector<1x16x8xf32>
    %77 = vector.shape_cast %76 : vector<1x16x8xf32> to vector<16x8xf32>
    %cst_57 = arith.constant dense<0.000000e+00> : vector<32x8xf32>
    %78 = tpu.matmul %75, %77, %cst_57 {dimension_numbers = #tpu.dot_dimension_numbers<[1], [0], [0], [1], [0, 0, 1, 1], [], []>} : vector<32x16xf32>, vector<16x8xf32>, vector<32x8xf32> -> vector<32x8xf32>
    %79 = arith.addf %74, %78 : vector<32x8xf32>
    %80 = vector.extract_strided_slice %63 {offsets = [24, 0], sizes = [32, 16], strides = [1, 1]} : vector<64x16xf32> to vector<32x16xf32>
    %c3_58 = arith.constant 3 : index
    %c0_59 = arith.constant 0 : index
    %c0_60 = arith.constant 0 : index
    %81 = vector.load %arg6[%c3_58, %c0_59, %c0_60] : memref<5x16x8xf32, #tpu.memory_space<vmem>>, vector<1x16x8xf32>
    %82 = vector.shape_cast %81 : vector<1x16x8xf32> to vector<16x8xf32>
    %cst_61 = arith.constant dense<0.000000e+00> : vector<32x8xf32>
    %83 = tpu.matmul %80, %82, %cst_61 {dimension_numbers = #tpu.dot_dimension_numbers<[1], [0], [0], [1], [0, 0, 1, 1], [], []>} : vector<32x16xf32>, vector<16x8xf32>, vector<32x8xf32> -> vector<32x8xf32>
    %84 = arith.addf %79, %83 : vector<32x8xf32>
    %85 = vector.extract_strided_slice %63 {offsets = [32, 0], sizes = [32, 16], strides = [1, 1]} : vector<64x16xf32> to vector<32x16xf32>
    %c4_62 = arith.constant 4 : index
    %c0_63 = arith.constant 0 : index
    %c0_64 = arith.constant 0 : index
    %86 = vector.load %arg6[%c4_62, %c0_63, %c0_64] : memref<5x16x8xf32, #tpu.memory_space<vmem>>, vector<1x16x8xf32>
    %87 = vector.shape_cast %86 : vector<1x16x8xf32> to vector<16x8xf32>
    %cst_65 = arith.constant dense<0.000000e+00> : vector<32x8xf32>
    %88 = tpu.matmul %85, %87, %cst_65 {dimension_numbers = #tpu.dot_dimension_numbers<[1], [0], [0], [1], [0, 0, 1, 1], [], []>} : vector<32x16xf32>, vector<16x8xf32>, vector<32x8xf32> -> vector<32x8xf32>
    %89 = arith.addf %84, %88 : vector<32x8xf32>
    %c0_66 = arith.constant 0 : index
    %c0_67 = arith.constant 0 : index
    %90 = vector.load %arg7[%c0_66, %c0_67] : memref<1x8xf32, #tpu.memory_space<vmem>>, vector<1x8xf32>
    %91 = vector.broadcast %90 : vector<1x8xf32> to vector<32x8xf32>
    %92 = arith.addf %89, %91 : vector<32x8xf32>
    %cst_68 = arith.constant 0.000000e+00 : f32
    %93 = vector.broadcast %cst_68 : f32 to vector<32x8xf32>
    %94 = arith.maximumf %92, %93 : vector<32x8xf32>
    %95 = vector.extract_strided_slice %94 {offsets = [0, 0], sizes = [8, 4], strides = [1, 1]} : vector<32x8xf32> to vector<8x4xf32>
    %c0_69 = arith.constant 0 : index
    %c0_70 = arith.constant 0 : index
    %96 = vector.load %arg13[%c0_69, %c0_70] : memref<8x32xf32, #tpu.memory_space<vmem>>, vector<8x4xf32>
    tpu.vector_store %arg13[%c0_69, %c0_70], %95 {strides = array<i32>} : memref<8x32xf32, #tpu.memory_space<vmem>>, vector<8x4xf32>,
    %97 = vector.extract_strided_slice %94 {offsets = [8, 0], sizes = [8, 4], strides = [1, 1]} : vector<32x8xf32> to vector<8x4xf32>
    %c0_71 = arith.constant 0 : index
    %c4_72 = arith.constant 4 : index
    %98 = vector.load %arg13[%c0_71, %c4_72] : memref<8x32xf32, #tpu.memory_space<vmem>>, vector<8x4xf32>
    tpu.vector_store %arg13[%c0_71, %c4_72], %97 {strides = array<i32>} : memref<8x32xf32, #tpu.memory_space<vmem>>, vector<8x4xf32>,
    %99 = vector.extract_strided_slice %94 {offsets = [16, 0], sizes = [8, 4], strides = [1, 1]} : vector<32x8xf32> to vector<8x4xf32>
    %c0_73 = arith.constant 0 : index
    %c8 = arith.constant 8 : index
    %100 = vector.load %arg13[%c0_73, %c8] : memref<8x32xf32, #tpu.memory_space<vmem>>, vector<8x4xf32>
    tpu.vector_store %arg13[%c0_73, %c8], %99 {strides = array<i32>} : memref<8x32xf32, #tpu.memory_space<vmem>>, vector<8x4xf32>,
    %101 = vector.extract_strided_slice %94 {offsets = [24, 0], sizes = [8, 4], strides = [1, 1]} : vector<32x8xf32> to vector<8x4xf32>
    %c0_74 = arith.constant 0 : index
    %c12 = arith.constant 12 : index
    %102 = vector.load %arg13[%c0_74, %c12] : memref<8x32xf32, #tpu.memory_space<vmem>>, vector<8x4xf32>
    tpu.vector_store %arg13[%c0_74, %c12], %101 {strides = array<i32>} : memref<8x32xf32, #tpu.memory_space<vmem>>, vector<8x4xf32>,
    %103 = vector.extract_strided_slice %94 {offsets = [0, 4], sizes = [8, 4], strides = [1, 1]} : vector<32x8xf32> to vector<8x4xf32>
    %c0_75 = arith.constant 0 : index
    %c16 = arith.constant 16 : index
    %104 = vector.load %arg13[%c0_75, %c16] : memref<8x32xf32, #tpu.memory_space<vmem>>, vector<8x4xf32>
    tpu.vector_store %arg13[%c0_75, %c16], %103 {strides = array<i32>} : memref<8x32xf32, #tpu.memory_space<vmem>>, vector<8x4xf32>,
    %105 = vector.extract_strided_slice %94 {offsets = [8, 4], sizes = [8, 4], strides = [1, 1]} : vector<32x8xf32> to vector<8x4xf32>
    %c0_76 = arith.constant 0 : index
    %c20 = arith.constant 20 : index
    %106 = vector.load %arg13[%c0_76, %c20] : memref<8x32xf32, #tpu.memory_space<vmem>>, vector<8x4xf32>
    tpu.vector_store %arg13[%c0_76, %c20], %105 {strides = array<i32>} : memref<8x32xf32, #tpu.memory_space<vmem>>, vector<8x4xf32>,
    %107 = vector.extract_strided_slice %94 {offsets = [16, 4], sizes = [8, 4], strides = [1, 1]} : vector<32x8xf32> to vector<8x4xf32>
    %c0_77 = arith.constant 0 : index
    %c24 = arith.constant 24 : index
    %108 = vector.load %arg13[%c0_77, %c24] : memref<8x32xf32, #tpu.memory_space<vmem>>, vector<8x4xf32>
    tpu.vector_store %arg13[%c0_77, %c24], %107 {strides = array<i32>} : memref<8x32xf32, #tpu.memory_space<vmem>>, vector<8x4xf32>,
    %109 = vector.extract_strided_slice %94 {offsets = [24, 4], sizes = [8, 4], strides = [1, 1]} : vector<32x8xf32> to vector<8x4xf32>
    %c0_78 = arith.constant 0 : index
    %c28 = arith.constant 28 : index
    %110 = vector.load %arg13[%c0_78, %c28] : memref<8x32xf32, #tpu.memory_space<vmem>>, vector<8x4xf32>
    tpu.vector_store %arg13[%c0_78, %c28], %109 {strides = array<i32>} : memref<8x32xf32, #tpu.memory_space<vmem>>, vector<8x4xf32>,
    %c0_79 = arith.constant 0 : index
    %c0_80 = arith.constant 0 : index
    %111 = vector.load %arg13[%c0_79, %c0_80] : memref<8x32xf32, #tpu.memory_space<vmem>>, vector<8x32xf32>
    %c0_81 = arith.constant 0 : index
    %c0_82 = arith.constant 0 : index
    %112 = vector.load %arg8[%c0_81, %c0_82] : memref<32x32xf32, #tpu.memory_space<vmem>>, vector<32x32xf32>
    %cst_83 = arith.constant dense<0.000000e+00> : vector<8x32xf32>
    %113 = tpu.matmul %111, %112, %cst_83 {dimension_numbers = #tpu.dot_dimension_numbers<[1], [0], [0], [1], [0, 0, 1, 1], [], []>} : vector<8x32xf32>, vector<32x32xf32>, vector<8x32xf32> -> vector<8x32xf32>
    %c0_84 = arith.constant 0 : index
    %c0_85 = arith.constant 0 : index
    %114 = vector.load %arg9[%c0_84, %c0_85] : memref<1x32xf32, #tpu.memory_space<vmem>>, vector<1x32xf32>
    %115 = vector.broadcast %114 : vector<1x32xf32> to vector<8x32xf32>
    %116 = arith.addf %113, %115 : vector<8x32xf32>
    %cst_86 = arith.constant 0.000000e+00 : f32
    %117 = vector.broadcast %cst_86 : f32 to vector<8x32xf32>
    %118 = arith.maximumf %116, %117 : vector<8x32xf32>
    %c0_87 = arith.constant 0 : index
    %c0_88 = arith.constant 0 : index
    %119 = vector.load %arg10[%c0_87, %c0_88] : memref<32x128xf32, #tpu.memory_space<vmem>>, vector<32x128xf32>
    %cst_89 = arith.constant dense<0.000000e+00> : vector<8x128xf32>
    %120 = tpu.matmul %118, %119, %cst_89 {dimension_numbers = #tpu.dot_dimension_numbers<[1], [0], [0], [1], [0, 0, 1, 1], [], []>} : vector<8x32xf32>, vector<32x128xf32>, vector<8x128xf32> -> vector<8x128xf32>
    %c0_90 = arith.constant 0 : index
    %c0_91 = arith.constant 0 : index
    %121 = vector.load %arg11[%c0_90, %c0_91] : memref<1x128xf32, #tpu.memory_space<vmem>>, vector<1x128xf32>
    %122 = vector.broadcast %121 : vector<1x128xf32> to vector<8x128xf32>
    %123 = arith.addf %120, %122 : vector<8x128xf32>
    %c0_92 = arith.constant 0 : index
    %c0_93 = arith.constant 0 : index
    %c0_94 = arith.constant 0 : index
    %124 = vector.load %arg12[%c0_92, %c0_93, %c0_94] : memref<1x8x128xf32, #tpu.memory_space<vmem>>, vector<1x8x128xf32>
    %125 = vector.shape_cast %124 : vector<1x8x128xf32> to vector<8x128xf32>
    %126 = vector.shape_cast %123 : vector<8x128xf32> to vector<1x8x128xf32>
    tpu.vector_store %arg12[%c0_92, %c0_93, %c0_94], %126 {strides = array<i32>} : memref<1x8x128xf32, #tpu.memory_space<vmem>>, vector<1x8x128xf32>,
    return
  }
  func.func @transform_0(%arg0: i32) -> (i32, i32, i32) {
    %c0_i32 = arith.constant 0 : i32
    %c0_i32_0 = arith.constant 0 : i32
    %c0_i32_1 = arith.constant 0 : i32
    return %arg0, %c0_i32, %c0_i32_0 : i32, i32, i32
  }
  func.func @transform_1(%arg0: i32) -> (i32, i32, i32) {
    %c0_i32 = arith.constant 0 : i32
    %c0_i32_0 = arith.constant 0 : i32
    %c0_i32_1 = arith.constant 0 : i32
    %c0_i32_2 = arith.constant 0 : i32
    return %c0_i32, %c0_i32_0, %c0_i32_1 : i32, i32, i32
  }
  func.func @transform_2(%arg0: i32) -> (i32, i32) {
    %c0_i32 = arith.constant 0 : i32
    %c0_i32_0 = arith.constant 0 : i32
    %c0_i32_1 = arith.constant 0 : i32
    return %c0_i32, %c0_i32_0 : i32, i32
  }
  func.func @transform_3(%arg0: i32) -> (i32, i32, i32) {
    %c0_i32 = arith.constant 0 : i32
    %c0_i32_0 = arith.constant 0 : i32
    %c0_i32_1 = arith.constant 0 : i32
    %c0_i32_2 = arith.constant 0 : i32
    return %c0_i32, %c0_i32_0, %c0_i32_1 : i32, i32, i32
  }
  func.func @transform_4(%arg0: i32) -> (i32, i32) {
    %c0_i32 = arith.constant 0 : i32
    %c0_i32_0 = arith.constant 0 : i32
    %c0_i32_1 = arith.constant 0 : i32
    return %c0_i32, %c0_i32_0 : i32, i32
  }
  func.func @transform_5(%arg0: i32) -> (i32, i32, i32) {
    %c0_i32 = arith.constant 0 : i32
    %c0_i32_0 = arith.constant 0 : i32
    %c0_i32_1 = arith.constant 0 : i32
    %c0_i32_2 = arith.constant 0 : i32
    return %c0_i32, %c0_i32_0, %c0_i32_1 : i32, i32, i32
  }
  func.func @transform_6(%arg0: i32) -> (i32, i32) {
    %c0_i32 = arith.constant 0 : i32
    %c0_i32_0 = arith.constant 0 : i32
    %c0_i32_1 = arith.constant 0 : i32
    return %c0_i32, %c0_i32_0 : i32, i32
  }
  func.func @transform_7(%arg0: i32) -> (i32, i32) {
    %c0_i32 = arith.constant 0 : i32
    %c0_i32_0 = arith.constant 0 : i32
    %c0_i32_1 = arith.constant 0 : i32
    return %c0_i32, %c0_i32_0 : i32, i32
  }
  func.func @transform_8(%arg0: i32) -> (i32, i32) {
    %c0_i32 = arith.constant 0 : i32
    %c0_i32_0 = arith.constant 0 : i32
    %c0_i32_1 = arith.constant 0 : i32
    return %c0_i32, %c0_i32_0 : i32, i32
  }
  func.func @transform_9(%arg0: i32) -> (i32, i32) {
    %c0_i32 = arith.constant 0 : i32
    %c0_i32_0 = arith.constant 0 : i32
    %c0_i32_1 = arith.constant 0 : i32
    return %c0_i32, %c0_i32_0 : i32, i32
  }
  func.func @transform_10(%arg0: i32) -> (i32, i32) {
    %c0_i32 = arith.constant 0 : i32
    %c0_i32_0 = arith.constant 0 : i32
    %c0_i32_1 = arith.constant 0 : i32
    return %c0_i32, %c0_i32_0 : i32, i32
  }
  func.func @transform_11(%arg0: i32) -> (i32, i32, i32) {
    %c0_i32 = arith.constant 0 : i32
    %c0_i32_0 = arith.constant 0 : i32
    %c0_i32_1 = arith.constant 0 : i32
    return %arg0, %c0_i32, %c0_i32_0 : i32, i32, i32
  }
}

</mosaic_0001>

<llo_original>
// kernel: forward.1
$region0: #{forward.1}
  #allocation0 [shape = 'u32[]', space=smem, size = 0x4, offset = 0x4, fixed_abs, tag = 'smem constant byte address 0x4 - core index']
  #allocation1 [shape = 'u32[144,128]{1,0:T(1,128)}', space=vmem, size = 0x12000, scoped, tag = 'internal scratch']
  #allocation2 [shape = 'f32[8,32]{1,0:T(8,128)}', space=vmem, size = 0x1000, scoped, tag = 'scratch operand']
  %s0 = inlined_call_operand.vmem [shape: f32[1,128,64], index: 0, kind: input, shape index: {}]
  %s1 = inlined_call_operand.vmem [shape: f32[5,64,24], index: 1, kind: input, shape index: {}]
  %s2 = inlined_call_operand.vmem [shape: f32[1,24], index: 2, kind: input, shape index: {}]
  %s3 = inlined_call_operand.vmem [shape: f32[5,24,16], index: 3, kind: input, shape index: {}]
  %s4 = inlined_call_operand.vmem [shape: f32[1,16], index: 4, kind: input, shape index: {}]
  %s5 = inlined_call_operand.vmem [shape: f32[5,16,8], index: 5, kind: input, shape index: {}]
  %s6 = inlined_call_operand.vmem [shape: f32[1,8], index: 6, kind: input, shape index: {}]
  %s7 = inlined_call_operand.vmem [shape: f32[32,32], index: 7, kind: input, shape index: {}]
  %s8 = inlined_call_operand.vmem [shape: f32[1,32], index: 8, kind: input, shape index: {}]
  %s9 = inlined_call_operand.vmem [shape: f32[32,128], index: 9, kind: input, shape index: {}]
  %s10 = inlined_call_operand.vmem [shape: f32[1,128], index: 10, kind: input, shape index: {}]
  %s11 = inlined_call_operand.vmem [shape: f32[1,8,128], index: 11, kind: output, shape index: {}]
  %s12 = sld [smem:[#allocation0]]
  $region54: #{forward.1} parent=0
    _
  %s14 = ssub.s32 1, %s12
  %s15 = scalar_select 0, %s14, %s12
  // Predicated region
  $region2: #{forward.1} parent=0 // pred_check
    _
  $region3: #{forward.1} parent=0 // pred_check_branch
    %17 = sbr.rel (0) target = $region5
  $region4: #{forward.1} parent=0 // pred_region
    _
  $region5: #{forward.1} parent=0 // pred_fallthru
    _
  // Predicated region
  $region6: #{forward.1} parent=0 // pred_check
    _
  $region7: #{forward.1} parent=0 // pred_check_branch
    %19 = sbr.rel (0) target = $region9
  $region8: #{forward.1} parent=0 // pred_region
    _
  $region9: #{forward.1} parent=0 // pred_fallthru
    _
  // Predicated region
  $region10: #{forward.1} parent=0 // pred_check
    _
  $region11: #{forward.1} parent=0 // pred_check_branch
    %21 = sbr.rel (0) target = $region13
  $region12: #{forward.1} parent=0 // pred_region
    _
  $region13: #{forward.1} parent=0 // pred_fallthru
    _
  // Predicated region
  $region14: #{forward.1} parent=0 // pred_check
    _
  $region15: #{forward.1} parent=0 // pred_check_branch
    %23 = sbr.rel (0) target = $region17
  $region16: #{forward.1} parent=0 // pred_region
    _
  $region17: #{forward.1} parent=0 // pred_fallthru
    _
  // Predicated region
  $region18: #{forward.1} parent=0 // pred_check
    _
  $region19: #{forward.1} parent=0 // pred_check_branch
    %25 = sbr.rel (0) target = $region21
  $region20: #{forward.1} parent=0 // pred_region
    _
  $region21: #{forward.1} parent=0 // pred_fallthru
    _
  // Predicated region
  $region22: #{forward.1} parent=0 // pred_check
    _
  $region23: #{forward.1} parent=0 // pred_check_branch
    %27 = sbr.rel (0) target = $region25
  $region24: #{forward.1} parent=0 // pred_region
    _
  $region25: #{forward.1} parent=0 // pred_fallthru
    _
  // Predicated region
  $region26: #{forward.1} parent=0 // pred_check
    _
  $region27: #{forward.1} parent=0 // pred_check_branch
    %29 = sbr.rel (0) target = $region29
  $region28: #{forward.1} parent=0 // pred_region
    _
  $region29: #{forward.1} parent=0 // pred_fallthru
    _
  // Predicated region
  $region30: #{forward.1} parent=0 // pred_check
    _
  $region31: #{forward.1} parent=0 // pred_check_branch
    %31 = sbr.rel (0) target = $region33
  $region32: #{forward.1} parent=0 // pred_region
    _
  $region33: #{forward.1} parent=0 // pred_fallthru
    _
  // Predicated region
  $region34: #{forward.1} parent=0 // pred_check
    _
  $region35: #{forward.1} parent=0 // pred_check_branch
    %33 = sbr.rel (0) target = $region37
  $region36: #{forward.1} parent=0 // pred_region
    _
  $region37: #{forward.1} parent=0 // pred_fallthru
    _
  // Predicated region
  $region38: #{forward.1} parent=0 // pred_check
    _
  $region39: #{forward.1} parent=0 // pred_check_branch
    %35 = sbr.rel (0) target = $region41
  $region40: #{forward.1} parent=0 // pred_region
    _
  $region41: #{forward.1} parent=0 // pred_fallthru
    _
  // Predicated region
  $region42: #{forward.1} parent=0 // pred_check
    _
  $region43: #{forward.1} parent=0 // pred_check_branch
    %37 = sbr.rel (0) target = $region45
  $region44: #{forward.1} parent=0 // pred_region
    _
  $region45: #{forward.1} parent=0 // pred_fallthru
    _
  %v38 = vld [vmem:[%s0] sm:$0xff]
  %v39 = vld [vmem:[%s0 + $0x8] sm:$0xff]
  %v40 = vld [vmem:[%s0 + $0x10] sm:$0xff]
  %v41 = vld [vmem:[%s0 + $0x18] sm:$0xff]
  %v42 = vld [vmem:[%s0 + $0x20] sm:$0xff]
  %v43 = vld [vmem:[%s0 + $0x28] sm:$0xff]
  %v44 = vld [vmem:[%s0 + $0x30] sm:$0xff]
  %v45 = vld [vmem:[%s0 + $0x38] sm:$0xff]
  %v46 = vld [vmem:[%s0 + $0x40] sm:$0xff]
  %v47 = vld [vmem:[%s0 + $0x48] sm:$0xff]
  %v48 = vld [vmem:[%s0 + $0x50] sm:$0xff]
  %v49 = vld [vmem:[%s0 + $0x58] sm:$0xff]
  %v50 = vld [vmem:[%s0 + $0x60] sm:$0xff]
  %v51 = vld [vmem:[%s0 + $0x68] sm:$0xff]
  %v52 = vld [vmem:[%s0 + $0x70] sm:$0xff]
  %v53 = vld [vmem:[%s0 + $0x78] sm:$0xff]
  %v54 = vld [vmem:[%s1] sm:$0xff]
  %v55 = vld [vmem:[%s1 + $0x8] sm:$0xff]
  %v56 = vld [vmem:[%s1 + $0x10] sm:$0xff]
  %v57 = vld [vmem:[%s1 + $0x18] sm:$0xff]
  %v58 = vld [vmem:[%s1 + $0x20] sm:$0xff]
  %v59 = vld [vmem:[%s1 + $0x28] sm:$0xff]
  %v60 = vld [vmem:[%s1 + $0x30] sm:$0xff]
  %v61 = vld [vmem:[%s1 + $0x38] sm:$0xff]
  %s62 = scalar_lea.vmem %s1, 64
  %v63 = vld [vmem:[%s62] sm:$0xff]
  %v64 = vld [vmem:[%s62 + $0x8] sm:$0xff]
  %v65 = vld [vmem:[%s62 + $0x10] sm:$0xff]
  %v66 = vld [vmem:[%s62 + $0x18] sm:$0xff]
  %v67 = vld [vmem:[%s62 + $0x20] sm:$0xff]
  %v68 = vld [vmem:[%s62 + $0x28] sm:$0xff]
  %v69 = vld [vmem:[%s62 + $0x30] sm:$0xff]
  %v70 = vld [vmem:[%s62 + $0x38] sm:$0xff]
  %vm71 = vcmask 523264
  %v73 = vsel %vm71, %v39, 0
  %v76 = vsel %vm71, %v40, 0
  %v79 = vsel %vm71, %v41, 0
  %v82 = vsel %vm71, %v42, 0
  %v85 = vsel %vm71, %v43, 0
  %v88 = vsel %vm71, %v44, 0
  %v91 = vsel %vm71, %v45, 0
  %v94 = vsel %vm71, %v46, 0
  %v97 = vsel %vm71, %v47, 0
  %v100 = vsel %vm71, %v48, 0
  %v103 = vsel %vm71, %v49, 0
  %v106 = vsel %vm71, %v50, 0
  %108 = vmatprep.subr.mxu0 0.0
  %109 = vmatpush1.msra.mxu0 0.0
  %110 = vmatprep.subr.mxu0 0.0
  %111 = vmatpush1.msra.mxu0 0.0
  %112 = vmatprep.subr.mxu0 0.0
  %113 = vmatpush1.msra.mxu0 0.0
  %114 = vmatprep.subr.mxu0 0.0
  %115 = vmatpush1.msra.mxu0 0.0
  %116 = vmatprep.subr.mxu0 0.0
  %117 = vmatpush1.msra.mxu0 0.0
  %118 = vmatprep.subr.mxu0 0.0
  %119 = vmatpush1.msra.mxu0 0.0
  %120 = vmatprep.subr.mxu0 0.0
  %121 = vmatpush1.msra.mxu0 0.0
  %122 = vmatprep.subr.mxu0 0.0
  %123 = vmatpush1.msra.mxu0 0.0
  %124 = vmatprep.subr.mxu0 0.0
  %125 = vmatpush1.msra.mxu0 %v70
  %126 = vmatprep.subr.mxu0 0.0
  %127 = vmatpush1.msra.mxu0 %v69
  %128 = vmatprep.subr.mxu0 0.0
  %129 = vmatpush1.msra.mxu0 %v68
  %130 = vmatprep.subr.mxu0 0.0
  %131 = vmatpush1.msra.mxu0 %v67
  %132 = vmatprep.subr.mxu0 0.0
  %133 = vmatpush1.msra.mxu0 %v66
  %134 = vmatprep.subr.mxu0 0.0
  %135 = vmatpush1.msra.mxu0 %v65
  %136 = vmatprep.subr.mxu0 0.0
  %137 = vmatpush1.msra.mxu0 %v64
  %138 = vmatprep.subr.mxu0 0.0
  %139 = vmatpush1.msra.mxu0 %v63
  %140 = vmatprep.subr.mxu0 0.0
  %141 = vmatpush2.msra.mxu0 0.0
  %142 = vmatprep.subr.mxu0 0.0
  %143 = vmatpush2.msra.mxu0 0.0
  %144 = vmatprep.subr.mxu0 0.0
  %145 = vmatpush2.msra.mxu0 0.0
  %146 = vmatprep.subr.mxu0 0.0
  %147 = vmatpush2.msra.mxu0 0.0
  %148 = vmatprep.subr.mxu0 0.0
  %149 = vmatpush2.msra.mxu0 0.0
  %150 = vmatprep.subr.mxu0 0.0
  %151 = vmatpush2.msra.mxu0 0.0
  %152 = vmatprep.subr.mxu0 0.0
  %153 = vmatpush2.msra.mxu0 0.0
  %154 = vmatprep.subr.mxu0 0.0
  %155 = vmatpush2.msra.mxu0 0.0
  %156 = vmatprep.subr.mxu0 0.0
  %157 = vmatpush2.msra.mxu0 0.0
  %158 = vmatprep.subr.mxu0 0.0
  %159 = vmatpush2.msra.mxu0 0.0
  %160 = vmatprep.subr.mxu0 0.0
  %161 = vmatpush2.msra.mxu0 0.0
  %162 = vmatprep.subr.mxu0 0.0
  %163 = vmatpush2.msra.mxu0 0.0
  %164 = vmatprep.subr.mxu0 0.0
  %165 = vmatpush2.msra.mxu0 0.0
  %166 = vmatprep.subr.mxu0 0.0
  %167 = vmatpush2.msra.mxu0 0.0
  %168 = vmatprep.subr.mxu0 0.0
  %169 = vmatpush2.msra.mxu0 0.0
  %170 = vmatprep.subr.mxu0 0.0
  %171 = vmatpush2.msra.mxu0 0.0
  %172 = vmatprep.mubr.f32.mxu0 0.0
  %173 = vmatmul.mubr.f32.gmra.mxu0 %v73
  %v174 = vpop.f32.mrf.mxu0
  %v175 = vadd.f32 0.0, %v174
  %v176 = vpop.f32.mrf.mxu0
  %177 = vmatprep.mubr.f32.mxu0 0.0
  %178 = vmatmul.mubr.f32.gmra.mxu0 %v76
  %v179 = vpop.f32.mrf.mxu0
  %v180 = vadd.f32 0.0, %v179
  %v181 = vpop.f32.mrf.mxu0
  %182 = vmatprep.mubr.f32.mxu0 0.0
  %183 = vmatmul.mubr.f32.gmra.mxu0 %v79
  %v184 = vpop.f32.mrf.mxu0
  %v185 = vadd.f32 0.0, %v184
  %v186 = vpop.f32.mrf.mxu0
  %187 = vmatprep.mubr.f32.mxu0 0.0
  %188 = vmatmul.mubr.f32.gmra.mxu0 %v82
  %v189 = vpop.f32.mrf.mxu0
  %v190 = vadd.f32 0.0, %v189
  %v191 = vpop.f32.mrf.mxu0
  %192 = vmatprep.mubr.f32.mxu0 0.0
  %193 = vmatmul.mubr.f32.gmra.mxu0 %v85
  %v194 = vpop.f32.mrf.mxu0
  %v195 = vadd.f32 0.0, %v194
  %v196 = vpop.f32.mrf.mxu0
  %197 = vmatprep.mubr.f32.mxu0 0.0
  %198 = vmatmul.mubr.f32.gmra.mxu0 %v88
  %v199 = vpop.f32.mrf.mxu0
  %v200 = vadd.f32 0.0, %v199
  %v201 = vpop.f32.mrf.mxu0
  %202 = vmatprep.mubr.f32.mxu0 0.0
  %203 = vmatmul.mubr.f32.gmra.mxu0 %v91
  %v204 = vpop.f32.mrf.mxu0
  %v205 = vadd.f32 0.0, %v204
  %v206 = vpop.f32.mrf.mxu0
  %207 = vmatprep.mubr.f32.mxu0 0.0
  %208 = vmatmul.mubr.f32.gmra.mxu0 %v94
  %v209 = vpop.f32.mrf.mxu0
  %v210 = vadd.f32 0.0, %v209
  %v211 = vpop.f32.mrf.mxu0
  %212 = vmatprep.mubr.f32.mxu0 0.0
  %213 = vmatmul.mubr.f32.gmra.mxu0 %v97
  %v214 = vpop.f32.mrf.mxu0
  %v215 = vadd.f32 0.0, %v214
  %v216 = vpop.f32.mrf.mxu0
  %217 = vmatprep.mubr.f32.mxu0 0.0
  %218 = vmatmul.mubr.f32.gmra.mxu0 %v100
  %v219 = vpop.f32.mrf.mxu0
  %v220 = vadd.f32 0.0, %v219
  %v221 = vpop.f32.mrf.mxu0
  %222 = vmatprep.mubr.f32.mxu0 0.0
  %223 = vmatmul.mubr.f32.gmra.mxu0 %v103
  %v224 = vpop.f32.mrf.mxu0
  %v225 = vadd.f32 0.0, %v224
  %v226 = vpop.f32.mrf.mxu0
  %227 = vmatprep.mubr.f32.mxu0 0.0
  %228 = vmatmul.mubr.f32.gmra.mxu0 %v106
  %v229 = vpop.f32.mrf.mxu0
  %v230 = vadd.f32 0.0, %v229
  %v231 = vpop.f32.mrf.mxu0
  %232 = vdwg.mxu0
  %v234 = vsel %vm71, %v38, 0
  %236 = vmatprep.subr.mxu0 0.0
  %237 = vmatpush1.msra.mxu0 0.0
  %238 = vmatprep.subr.mxu0 0.0
  %239 = vmatpush1.msra.mxu0 0.0
  %240 = vmatprep.subr.mxu0 0.0
  %241 = vmatpush1.msra.mxu0 0.0
  %242 = vmatprep.subr.mxu0 0.0
  %243 = vmatpush1.msra.mxu0 0.0
  %244 = vmatprep.subr.mxu0 0.0
  %245 = vmatpush1.msra.mxu0 0.0
  %246 = vmatprep.subr.mxu0 0.0
  %247 = vmatpush1.msra.mxu0 0.0
  %248 = vmatprep.subr.mxu0 0.0
  %249 = vmatpush1.msra.mxu0 0.0
  %250 = vmatprep.subr.mxu0 0.0
  %251 = vmatpush1.msra.mxu0 0.0
  %252 = vmatprep.subr.mxu0 0.0
  %253 = vmatpush1.msra.mxu0 %v61
  %254 = vmatprep.subr.mxu0 0.0
  %255 = vmatpush1.msra.mxu0 %v60
  %256 = vmatprep.subr.mxu0 0.0
  %257 = vmatpush1.msra.mxu0 %v59
  %258 = vmatprep.subr.mxu0 0.0
  %259 = vmatpush1.msra.mxu0 %v58
  %260 = vmatprep.subr.mxu0 0.0
  %261 = vmatpush1.msra.mxu0 %v57
  %262 = vmatprep.subr.mxu0 0.0
  %263 = vmatpush1.msra.mxu0 %v56
  %264 = vmatprep.subr.mxu0 0.0
  %265 = vmatpush1.msra.mxu0 %v55
  %266 = vmatprep.subr.mxu0 0.0
  %267 = vmatpush1.msra.mxu0 %v54
  %268 = vmatprep.subr.mxu0 0.0
  %269 = vmatpush2.msra.mxu0 0.0
  %270 = vmatprep.subr.mxu0 0.0
  %271 = vmatpush2.msra.mxu0 0.0
  %272 = vmatprep.subr.mxu0 0.0
  %273 = vmatpush2.msra.mxu0 0.0
  %274 = vmatprep.subr.mxu0 0.0
  %275 = vmatpush2.msra.mxu0 0.0
  %276 = vmatprep.subr.mxu0 0.0
  %277 = vmatpush2.msra.mxu0 0.0
  %278 = vmatprep.subr.mxu0 0.0
  %279 = vmatpush2.msra.mxu0 0.0
  %280 = vmatprep.subr.mxu0 0.0
  %281 = vmatpush2.msra.mxu0 0.0
  %282 = vmatprep.subr.mxu0 0.0
  %283 = vmatpush2.msra.mxu0 0.0
  %284 = vmatprep.subr.mxu0 0.0
  %285 = vmatpush2.msra.mxu0 0.0
  %286 = vmatprep.subr.mxu0 0.0
  %287 = vmatpush2.msra.mxu0 0.0
  %288 = vmatprep.subr.mxu0 0.0
  %289 = vmatpush2.msra.mxu0 0.0
  %290 = vmatprep.subr.mxu0 0.0
  %291 = vmatpush2.msra.mxu0 0.0
  %292 = vmatprep.subr.mxu0 0.0
  %293 = vmatpush2.msra.mxu0 0.0
  %294 = vmatprep.subr.mxu0 0.0
  %295 = vmatpush2.msra.mxu0 0.0
  %296 = vmatprep.subr.mxu0 0.0
  %297 = vmatpush2.msra.mxu0 0.0
  %298 = vmatprep.subr.mxu0 0.0
  %299 = vmatpush2.msra.mxu0 0.0
  %300 = vmatprep.mubr.f32.mxu0 0.0
  %301 = vmatmul.mubr.f32.gmra.mxu0 %v234
  %v302 = vpop.f32.mrf.mxu0
  %v303 = vadd.f32 %v175, %v302
  %v304 = vpop.f32.mrf.mxu0
  %305 = vmatprep.mubr.f32.mxu0 0.0
  %306 = vmatmul.mubr.f32.gmra.mxu0 %v73
  %v307 = vpop.f32.mrf.mxu0
  %v308 = vadd.f32 %v180, %v307
  %v309 = vpop.f32.mrf.mxu0
  %310 = vmatprep.mubr.f32.mxu0 0.0
  %311 = vmatmul.mubr.f32.gmra.mxu0 %v76
  %v312 = vpop.f32.mrf.mxu0
  %v313 = vadd.f32 %v185, %v312
  %v314 = vpop.f32.mrf.mxu0
  %315 = vmatprep.mubr.f32.mxu0 0.0
  %316 = vmatmul.mubr.f32.gmra.mxu0 %v79
  %v317 = vpop.f32.mrf.mxu0
  %v318 = vadd.f32 %v190, %v317
  %v319 = vpop.f32.mrf.mxu0
  %320 = vmatprep.mubr.f32.mxu0 0.0
  %321 = vmatmul.mubr.f32.gmra.mxu0 %v82
  %v322 = vpop.f32.mrf.mxu0
  %v323 = vadd.f32 %v195, %v322
  %v324 = vpop.f32.mrf.mxu0
  %325 = vmatprep.mubr.f32.mxu0 0.0
  %326 = vmatmul.mubr.f32.gmra.mxu0 %v85
  %v327 = vpop.f32.mrf.mxu0
  %v328 = vadd.f32 %v200, %v327
  %v329 = vpop.f32.mrf.mxu0
  %330 = vmatprep.mubr.f32.mxu0 0.0
  %331 = vmatmul.mubr.f32.gmra.mxu0 %v88
  %v332 = vpop.f32.mrf.mxu0
  %v333 = vadd.f32 %v205, %v332
  %v334 = vpop.f32.mrf.mxu0
  %335 = vmatprep.mubr.f32.mxu0 0.0
  %336 = vmatmul.mubr.f32.gmra.mxu0 %v91
  %v337 = vpop.f32.mrf.mxu0
  %v338 = vadd.f32 %v210, %v337
  %v339 = vpop.f32.mrf.mxu0
  %340 = vmatprep.mubr.f32.mxu0 0.0
  %341 = vmatmul.mubr.f32.gmra.mxu0 %v94
  %v342 = vpop.f32.mrf.mxu0
  %v343 = vadd.f32 %v215, %v342
  %v344 = vpop.f32.mrf.mxu0
  %345 = vmatprep.mubr.f32.mxu0 0.0
  %346 = vmatmul.mubr.f32.gmra.mxu0 %v97
  %v347 = vpop.f32.mrf.mxu0
  %v348 = vadd.f32 %v220, %v347
  %v349 = vpop.f32.mrf.mxu0
  %350 = vmatprep.mubr.f32.mxu0 0.0
  %351 = vmatmul.mubr.f32.gmra.mxu0 %v100
  %v352 = vpop.f32.mrf.mxu0
  %v353 = vadd.f32 %v225, %v352
  %v354 = vpop.f32.mrf.mxu0
  %355 = vmatprep.mubr.f32.mxu0 0.0
  %356 = vmatmul.mubr.f32.gmra.mxu0 %v103
  %v357 = vpop.f32.mrf.mxu0
  %v358 = vadd.f32 %v230, %v357
  %v359 = vpop.f32.mrf.mxu0
  %360 = vdwg.mxu0
  %s361 = scalar_lea.vmem %s1, 128
  %v362 = vld [vmem:[%s361] sm:$0xff]
  %v363 = vld [vmem:[%s361 + $0x8] sm:$0xff]
  %v364 = vld [vmem:[%s361 + $0x10] sm:$0xff]
  %v365 = vld [vmem:[%s361 + $0x18] sm:$0xff]
  %v366 = vld [vmem:[%s361 + $0x20] sm:$0xff]
  %v367 = vld [vmem:[%s361 + $0x28] sm:$0xff]
  %v368 = vld [vmem:[%s361 + $0x30] sm:$0xff]
  %v369 = vld [vmem:[%s361 + $0x38] sm:$0xff]
  %v371 = vsel %vm71, %v51, 0
  %373 = vmatprep.subr.mxu0 0.0
  %374 = vmatpush1.msra.mxu0 0.0
  %375 = vmatprep.subr.mxu0 0.0
  %376 = vmatpush1.msra.mxu0 0.0
  %377 = vmatprep.subr.mxu0 0.0
  %378 = vmatpush1.msra.mxu0 0.0
  %379 = vmatprep.subr.mxu0 0.0
  %380 = vmatpush1.msra.mxu0 0.0
  %381 = vmatprep.subr.mxu0 0.0
  %382 = vmatpush1.msra.mxu0 0.0
  %383 = vmatprep.subr.mxu0 0.0
  %384 = vmatpush1.msra.mxu0 0.0
  %385 = vmatprep.subr.mxu0 0.0
  %386 = vmatpush1.msra.mxu0 0.0
  %387 = vmatprep.subr.mxu0 0.0
  %388 = vmatpush1.msra.mxu0 0.0
  %389 = vmatprep.subr.mxu0 0.0
  %390 = vmatpush1.msra.mxu0 %v369
  %391 = vmatprep.subr.mxu0 0.0
  %392 = vmatpush1.msra.mxu0 %v368
  %393 = vmatprep.subr.mxu0 0.0
  %394 = vmatpush1.msra.mxu0 %v367
  %395 = vmatprep.subr.mxu0 0.0
  %396 = vmatpush1.msra.mxu0 %v366
  %397 = vmatprep.subr.mxu0 0.0
  %398 = vmatpush1.msra.mxu0 %v365
  %399 = vmatprep.subr.mxu0 0.0
  %400 = vmatpush1.msra.mxu0 %v364
  %401 = vmatprep.subr.mxu0 0.0
  %402 = vmatpush1.msra.mxu0 %v363
  %403 = vmatprep.subr.mxu0 0.0
  %404 = vmatpush1.msra.mxu0 %v362
  %405 = vmatprep.subr.mxu0 0.0
  %406 = vmatpush2.msra.mxu0 0.0
  %407 = vmatprep.subr.mxu0 0.0
  %408 = vmatpush2.msra.mxu0 0.0
  %409 = vmatprep.subr.mxu0 0.0
  %410 = vmatpush2.msra.mxu0 0.0
  %411 = vmatprep.subr.mxu0 0.0
  %412 = vmatpush2.msra.mxu0 0.0
  %413 = vmatprep.subr.mxu0 0.0
  %414 = vmatpush2.msra.mxu0 0.0
  %415 = vmatprep.subr.mxu0 0.0
  %416 = vmatpush2.msra.mxu0 0.0
  %417 = vmatprep.subr.mxu0 0.0
  %418 = vmatpush2.msra.mxu0 0.0
  %419 = vmatprep.subr.mxu0 0.0
  %420 = vmatpush2.msra.mxu0 0.0
  %421 = vmatprep.subr.mxu0 0.0
  %422 = vmatpush2.msra.mxu0 0.0
  %423 = vmatprep.subr.mxu0 0.0
  %424 = vmatpush2.msra.mxu0 0.0
  %425 = vmatprep.subr.mxu0 0.0
  %426 = vmatpush2.msra.mxu0 0.0
  %427 = vmatprep.subr.mxu0 0.0
  %428 = vmatpush2.msra.mxu0 0.0
  %429 = vmatprep.subr.mxu0 0.0
  %430 = vmatpush2.msra.mxu0 0.0
  %431 = vmatprep.subr.mxu0 0.0
  %432 = vmatpush2.msra.mxu0 0.0
  %433 = vmatprep.subr.mxu0 0.0
  %434 = vmatpush2.msra.mxu0 0.0
  %435 = vmatprep.subr.mxu0 0.0
  %436 = vmatpush2.msra.mxu0 0.0
  %437 = vmatprep.mubr.f32.mxu0 0.0
  %438 = vmatmul.mubr.f32.gmra.mxu0 %v76
  %v439 = vpop.f32.mrf.mxu0
  %v440 = vadd.f32 0.0, %v439
  %v441 = vpop.f32.mrf.mxu0
  %442 = vmatprep.mubr.f32.mxu0 0.0
  %443 = vmatmul.mubr.f32.gmra.mxu0 %v79
  %v444 = vpop.f32.mrf.mxu0
  %v445 = vadd.f32 0.0, %v444
  %v446 = vpop.f32.mrf.mxu0
  %447 = vmatprep.mubr.f32.mxu0 0.0
  %448 = vmatmul.mubr.f32.gmra.mxu0 %v82
  %v449 = vpop.f32.mrf.mxu0
  %v450 = vadd.f32 0.0, %v449
  %v451 = vpop.f32.mrf.mxu0
  %452 = vmatprep.mubr.f32.mxu0 0.0
  %453 = vmatmul.mubr.f32.gmra.mxu0 %v85
  %v454 = vpop.f32.mrf.mxu0
  %v455 = vadd.f32 0.0, %v454
  %v456 = vpop.f32.mrf.mxu0
  %457 = vmatprep.mubr.f32.mxu0 0.0
  %458 = vmatmul.mubr.f32.gmra.mxu0 %v88
  %v459 = vpop.f32.mrf.mxu0
  %v460 = vadd.f32 0.0, %v459
  %v461 = vpop.f32.mrf.mxu0
  %462 = vmatprep.mubr.f32.mxu0 0.0
  %463 = vmatmul.mubr.f32.gmra.mxu0 %v91
  %v464 = vpop.f32.mrf.mxu0
  %v465 = vadd.f32 0.0, %v464
  %v466 = vpop.f32.mrf.mxu0
  %467 = vmatprep.mubr.f32.mxu0 0.0
  %468 = vmatmul.mubr.f32.gmra.mxu0 %v94
  %v469 = vpop.f32.mrf.mxu0
  %v470 = vadd.f32 0.0, %v469
  %v471 = vpop.f32.mrf.mxu0
  %472 = vmatprep.mubr.f32.mxu0 0.0
  %473 = vmatmul.mubr.f32.gmra.mxu0 %v97
  %v474 = vpop.f32.mrf.mxu0
  %v475 = vadd.f32 0.0, %v474
  %v476 = vpop.f32.mrf.mxu0
  %477 = vmatprep.mubr.f32.mxu0 0.0
  %478 = vmatmul.mubr.f32.gmra.mxu0 %v100
  %v479 = vpop.f32.mrf.mxu0
  %v480 = vadd.f32 0.0, %v479
  %v481 = vpop.f32.mrf.mxu0
  %482 = vmatprep.mubr.f32.mxu0 0.0
  %483 = vmatmul.mubr.f32.gmra.mxu0 %v103
  %v484 = vpop.f32.mrf.mxu0
  %v485 = vadd.f32 0.0, %v484
  %v486 = vpop.f32.mrf.mxu0
  %487 = vmatprep.mubr.f32.mxu0 0.0
  %488 = vmatmul.mubr.f32.gmra.mxu0 %v106
  %v489 = vpop.f32.mrf.mxu0
  %v490 = vadd.f32 0.0, %v489
  %v491 = vpop.f32.mrf.mxu0
  %492 = vmatprep.mubr.f32.mxu0 0.0
  %493 = vmatmul.mubr.f32.gmra.mxu0 %v371
  %v494 = vpop.f32.mrf.mxu0
  %v495 = vadd.f32 0.0, %v494
  %v496 = vpop.f32.mrf.mxu0
  %497 = vdwg.mxu0
  %v498 = vadd.f32 %v303, %v440
  %v499 = vadd.f32 %v308, %v445
  %v500 = vadd.f32 %v313, %v450
  %v501 = vadd.f32 %v318, %v455
  %v502 = vadd.f32 %v323, %v460
  %v503 = vadd.f32 %v328, %v465
  %v504 = vadd.f32 %v333, %v470
  %v505 = vadd.f32 %v338, %v475
  %v506 = vadd.f32 %v343, %v480
  %v507 = vadd.f32 %v348, %v485
  %v508 = vadd.f32 %v353, %v490
  %v509 = vadd.f32 %v358, %v495
  %s510 = scalar_lea.vmem %s1, 192
  %v511 = vld [vmem:[%s510] sm:$0xff]
  %v512 = vld [vmem:[%s510 + $0x8] sm:$0xff]
  %v513 = vld [vmem:[%s510 + $0x10] sm:$0xff]
  %v514 = vld [vmem:[%s510 + $0x18] sm:$0xff]
  %v515 = vld [vmem:[%s510 + $0x20] sm:$0xff]
  %v516 = vld [vmem:[%s510 + $0x28] sm:$0xff]
  %v517 = vld [vmem:[%s510 + $0x30] sm:$0xff]
  %v518 = vld [vmem:[%s510 + $0x38] sm:$0xff]
  %v520 = vsel %vm71, %v52, 0
  %522 = vmatprep.subr.mxu0 0.0
  %523 = vmatpush1.msra.mxu0 0.0
  %524 = vmatprep.subr.mxu0 0.0
  %525 = vmatpush1.msra.mxu0 0.0
  %526 = vmatprep.subr.mxu0 0.0
  %527 = vmatpush1.msra.mxu0 0.0
  %528 = vmatprep.subr.mxu0 0.0
  %529 = vmatpush1.msra.mxu0 0.0
  %530 = vmatprep.subr.mxu0 0.0
  %531 = vmatpush1.msra.mxu0 0.0
  %532 = vmatprep.subr.mxu0 0.0
  %533 = vmatpush1.msra.mxu0 0.0
  %534 = vmatprep.subr.mxu0 0.0
  %535 = vmatpush1.msra.mxu0 0.0
  %536 = vmatprep.subr.mxu0 0.0
  %537 = vmatpush1.msra.mxu0 0.0
  %538 = vmatprep.subr.mxu0 0.0
  %539 = vmatpush1.msra.mxu0 %v518
  %540 = vmatprep.subr.mxu0 0.0
  %541 = vmatpush1.msra.mxu0 %v517
  %542 = vmatprep.subr.mxu0 0.0
  %543 = vmatpush1.msra.mxu0 %v516
  %544 = vmatprep.subr.mxu0 0.0
  %545 = vmatpush1.msra.mxu0 %v515
  %546 = vmatprep.subr.mxu0 0.0
  %547 = vmatpush1.msra.mxu0 %v514
  %548 = vmatprep.subr.mxu0 0.0
  %549 = vmatpush1.msra.mxu0 %v513
  %550 = vmatprep.subr.mxu0 0.0
  %551 = vmatpush1.msra.mxu0 %v512
  %552 = vmatprep.subr.mxu0 0.0
  %553 = vmatpush1.msra.mxu0 %v511
  %554 = vmatprep.subr.mxu0 0.0
  %555 = vmatpush2.msra.mxu0 0.0
  %556 = vmatprep.subr.mxu0 0.0
  %557 = vmatpush2.msra.mxu0 0.0
  %558 = vmatprep.subr.mxu0 0.0
  %559 = vmatpush2.msra.mxu0 0.0
  %560 = vmatprep.subr.mxu0 0.0
  %561 = vmatpush2.msra.mxu0 0.0
  %562 = vmatprep.subr.mxu0 0.0
  %563 = vmatpush2.msra.mxu0 0.0
  %564 = vmatprep.subr.mxu0 0.0
  %565 = vmatpush2.msra.mxu0 0.0
  %566 = vmatprep.subr.mxu0 0.0
  %567 = vmatpush2.msra.mxu0 0.0
  %568 = vmatprep.subr.mxu0 0.0
  %569 = vmatpush2.msra.mxu0 0.0
  %570 = vmatprep.subr.mxu0 0.0
  %571 = vmatpush2.msra.mxu0 0.0
  %572 = vmatprep.subr.mxu0 0.0
  %573 = vmatpush2.msra.mxu0 0.0
  %574 = vmatprep.subr.mxu0 0.0
  %575 = vmatpush2.msra.mxu0 0.0
  %576 = vmatprep.subr.mxu0 0.0
  %577 = vmatpush2.msra.mxu0 0.0
  %578 = vmatprep.subr.mxu0 0.0
  %579 = vmatpush2.msra.mxu0 0.0
  %580 = vmatprep.subr.mxu0 0.0
  %581 = vmatpush2.msra.mxu0 0.0
  %582 = vmatprep.subr.mxu0 0.0
  %583 = vmatpush2.msra.mxu0 0.0
  %584 = vmatprep.subr.mxu0 0.0
  %585 = vmatpush2.msra.mxu0 0.0
  %586 = vmatprep.mubr.f32.mxu0 0.0
  %587 = vmatmul.mubr.f32.gmra.mxu0 %v79
  %v588 = vpop.f32.mrf.mxu0
  %v589 = vadd.f32 0.0, %v588
  %v590 = vpop.f32.mrf.mxu0
  %591 = vmatprep.mubr.f32.mxu0 0.0
  %592 = vmatmul.mubr.f32.gmra.mxu0 %v82
  %v593 = vpop.f32.mrf.mxu0
  %v594 = vadd.f32 0.0, %v593
  %v595 = vpop.f32.mrf.mxu0
  %596 = vmatprep.mubr.f32.mxu0 0.0
  %597 = vmatmul.mubr.f32.gmra.mxu0 %v85
  %v598 = vpop.f32.mrf.mxu0
  %v599 = vadd.f32 0.0, %v598
  %v600 = vpop.f32.mrf.mxu0
  %601 = vmatprep.mubr.f32.mxu0 0.0
  %602 = vmatmul.mubr.f32.gmra.mxu0 %v88
  %v603 = vpop.f32.mrf.mxu0
  %v604 = vadd.f32 0.0, %v603
  %v605 = vpop.f32.mrf.mxu0
  %606 = vmatprep.mubr.f32.mxu0 0.0
  %607 = vmatmul.mubr.f32.gmra.mxu0 %v91
  %v608 = vpop.f32.mrf.mxu0
  %v609 = vadd.f32 0.0, %v608
  %v610 = vpop.f32.mrf.mxu0
  %611 = vmatprep.mubr.f32.mxu0 0.0
  %612 = vmatmul.mubr.f32.gmra.mxu0 %v94
  %v613 = vpop.f32.mrf.mxu0
  %v614 = vadd.f32 0.0, %v613
  %v615 = vpop.f32.mrf.mxu0
  %616 = vmatprep.mubr.f32.mxu0 0.0
  %617 = vmatmul.mubr.f32.gmra.mxu0 %v97
  %v618 = vpop.f32.mrf.mxu0
  %v619 = vadd.f32 0.0, %v618
  %v620 = vpop.f32.mrf.mxu0
  %621 = vmatprep.mubr.f32.mxu0 0.0
  %622 = vmatmul.mubr.f32.gmra.mxu0 %v100
  %v623 = vpop.f32.mrf.mxu0
  %v624 = vadd.f32 0.0, %v623
  %v625 = vpop.f32.mrf.mxu0
  %626 = vmatprep.mubr.f32.mxu0 0.0
  %627 = vmatmul.mubr.f32.gmra.mxu0 %v103
  %v628 = vpop.f32.mrf.mxu0
  %v629 = vadd.f32 0.0, %v628
  %v630 = vpop.f32.mrf.mxu0
  %631 = vmatprep.mubr.f32.mxu0 0.0
  %632 = vmatmul.mubr.f32.gmra.mxu0 %v106
  %v633 = vpop.f32.mrf.mxu0
  %v634 = vadd.f32 0.0, %v633
  %v635 = vpop.f32.mrf.mxu0
  %636 = vmatprep.mubr.f32.mxu0 0.0
  %637 = vmatmul.mubr.f32.gmra.mxu0 %v371
  %v638 = vpop.f32.mrf.mxu0
  %v639 = vadd.f32 0.0, %v638
  %v640 = vpop.f32.mrf.mxu0
  %641 = vmatprep.mubr.f32.mxu0 0.0
  %642 = vmatmul.mubr.f32.gmra.mxu0 %v520
  %v643 = vpop.f32.mrf.mxu0
  %v644 = vadd.f32 0.0, %v643
  %v645 = vpop.f32.mrf.mxu0
  %646 = vdwg.mxu0
  %v647 = vadd.f32 %v498, %v589
  %v648 = vadd.f32 %v499, %v594
  %v649 = vadd.f32 %v500, %v599
  %v650 = vadd.f32 %v501, %v604
  %v651 = vadd.f32 %v502, %v609
  %v652 = vadd.f32 %v503, %v614
  %v653 = vadd.f32 %v504, %v619
  %v654 = vadd.f32 %v505, %v624
  %v655 = vadd.f32 %v506, %v629
  %v656 = vadd.f32 %v507, %v634
  %v657 = vadd.f32 %v508, %v639
  %v658 = vadd.f32 %v509, %v644
  %s659 = scalar_lea.vmem %s1, 256
  %v660 = vld [vmem:[%s659] sm:$0xff]
  %v661 = vld [vmem:[%s659 + $0x8] sm:$0xff]
  %v662 = vld [vmem:[%s659 + $0x10] sm:$0xff]
  %v663 = vld [vmem:[%s659 + $0x18] sm:$0xff]
  %v664 = vld [vmem:[%s659 + $0x20] sm:$0xff]
  %v665 = vld [vmem:[%s659 + $0x28] sm:$0xff]
  %v666 = vld [vmem:[%s659 + $0x30] sm:$0xff]
  %v667 = vld [vmem:[%s659 + $0x38] sm:$0xff]
  %v669 = vsel %vm71, %v53, 0
  %671 = vmatprep.subr.mxu0 0.0
  %672 = vmatpush1.msra.mxu0 0.0
  %673 = vmatprep.subr.mxu0 0.0
  %674 = vmatpush1.msra.mxu0 0.0
  %675 = vmatprep.subr.mxu0 0.0
  %676 = vmatpush1.msra.mxu0 0.0
  %677 = vmatprep.subr.mxu0 0.0
  %678 = vmatpush1.msra.mxu0 0.0
  %679 = vmatprep.subr.mxu0 0.0
  %680 = vmatpush1.msra.mxu0 0.0
  %681 = vmatprep.subr.mxu0 0.0
  %682 = vmatpush1.msra.mxu0 0.0
  %683 = vmatprep.subr.mxu0 0.0
  %684 = vmatpush1.msra.mxu0 0.0
  %685 = vmatprep.subr.mxu0 0.0
  %686 = vmatpush1.msra.mxu0 0.0
  %687 = vmatprep.subr.mxu0 0.0
  %688 = vmatpush1.msra.mxu0 %v667
  %689 = vmatprep.subr.mxu0 0.0
  %690 = vmatpush1.msra.mxu0 %v666
  %691 = vmatprep.subr.mxu0 0.0
  %692 = vmatpush1.msra.mxu0 %v665
  %693 = vmatprep.subr.mxu0 0.0
  %694 = vmatpush1.msra.mxu0 %v664
  %695 = vmatprep.subr.mxu0 0.0
  %696 = vmatpush1.msra.mxu0 %v663
  %697 = vmatprep.subr.mxu0 0.0
  %698 = vmatpush1.msra.mxu0 %v662
  %699 = vmatprep.subr.mxu0 0.0
  %700 = vmatpush1.msra.mxu0 %v661
  %701 = vmatprep.subr.mxu0 0.0
  %702 = vmatpush1.msra.mxu0 %v660
  %703 = vmatprep.subr.mxu0 0.0
  %704 = vmatpush2.msra.mxu0 0.0
  %705 = vmatprep.subr.mxu0 0.0
  %706 = vmatpush2.msra.mxu0 0.0
  %707 = vmatprep.subr.mxu0 0.0
  %708 = vmatpush2.msra.mxu0 0.0
  %709 = vmatprep.subr.mxu0 0.0
  %710 = vmatpush2.msra.mxu0 0.0
  %711 = vmatprep.subr.mxu0 0.0
  %712 = vmatpush2.msra.mxu0 0.0
  %713 = vmatprep.subr.mxu0 0.0
  %714 = vmatpush2.msra.mxu0 0.0
  %715 = vmatprep.subr.mxu0 0.0
  %716 = vmatpush2.msra.mxu0 0.0
  %717 = vmatprep.subr.mxu0 0.0
  %718 = vmatpush2.msra.mxu0 0.0
  %719 = vmatprep.subr.mxu0 0.0
  %720 = vmatpush2.msra.mxu0 0.0
  %721 = vmatprep.subr.mxu0 0.0
  %722 = vmatpush2.msra.mxu0 0.0
  %723 = vmatprep.subr.mxu0 0.0
  %724 = vmatpush2.msra.mxu0 0.0
  %725 = vmatprep.subr.mxu0 0.0
  %726 = vmatpush2.msra.mxu0 0.0
  %727 = vmatprep.subr.mxu0 0.0
  %728 = vmatpush2.msra.mxu0 0.0
  %729 = vmatprep.subr.mxu0 0.0
  %730 = vmatpush2.msra.mxu0 0.0
  %731 = vmatprep.subr.mxu0 0.0
  %732 = vmatpush2.msra.mxu0 0.0
  %733 = vmatprep.subr.mxu0 0.0
  %734 = vmatpush2.msra.mxu0 0.0
  %735 = vmatprep.mubr.f32.mxu0 0.0
  %736 = vmatmul.mubr.f32.gmra.mxu0 %v82
  %v737 = vpop.f32.mrf.mxu0
  %v738 = vadd.f32 0.0, %v737
  %v739 = vpop.f32.mrf.mxu0
  %740 = vmatprep.mubr.f32.mxu0 0.0
  %741 = vmatmul.mubr.f32.gmra.mxu0 %v85
  %v742 = vpop.f32.mrf.mxu0
  %v743 = vadd.f32 0.0, %v742
  %v744 = vpop.f32.mrf.mxu0
  %745 = vmatprep.mubr.f32.mxu0 0.0
  %746 = vmatmul.mubr.f32.gmra.mxu0 %v88
  %v747 = vpop.f32.mrf.mxu0
  %v748 = vadd.f32 0.0, %v747
  %v749 = vpop.f32.mrf.mxu0
  %750 = vmatprep.mubr.f32.mxu0 0.0
  %751 = vmatmul.mubr.f32.gmra.mxu0 %v91
  %v752 = vpop.f32.mrf.mxu0
  %v753 = vadd.f32 0.0, %v752
  %v754 = vpop.f32.mrf.mxu0
  %755 = vmatprep.mubr.f32.mxu0 0.0
  %756 = vmatmul.mubr.f32.gmra.mxu0 %v94
  %v757 = vpop.f32.mrf.mxu0
  %v758 = vadd.f32 0.0, %v757
  %v759 = vpop.f32.mrf.mxu0
  %760 = vmatprep.mubr.f32.mxu0 0.0
  %761 = vmatmul.mubr.f32.gmra.mxu0 %v97
  %v762 = vpop.f32.mrf.mxu0
  %v763 = vadd.f32 0.0, %v762
  %v764 = vpop.f32.mrf.mxu0
  %765 = vmatprep.mubr.f32.mxu0 0.0
  %766 = vmatmul.mubr.f32.gmra.mxu0 %v100
  %v767 = vpop.f32.mrf.mxu0
  %v768 = vadd.f32 0.0, %v767
  %v769 = vpop.f32.mrf.mxu0
  %770 = vmatprep.mubr.f32.mxu0 0.0
  %771 = vmatmul.mubr.f32.gmra.mxu0 %v103
  %v772 = vpop.f32.mrf.mxu0
  %v773 = vadd.f32 0.0, %v772
  %v774 = vpop.f32.mrf.mxu0
  %775 = vmatprep.mubr.f32.mxu0 0.0
  %776 = vmatmul.mubr.f32.gmra.mxu0 %v106
  %v777 = vpop.f32.mrf.mxu0
  %v778 = vadd.f32 0.0, %v777
  %v779 = vpop.f32.mrf.mxu0
  %780 = vmatprep.mubr.f32.mxu0 0.0
  %781 = vmatmul.mubr.f32.gmra.mxu0 %v371
  %v782 = vpop.f32.mrf.mxu0
  %v783 = vadd.f32 0.0, %v782
  %v784 = vpop.f32.mrf.mxu0
  %785 = vmatprep.mubr.f32.mxu0 0.0
  %786 = vmatmul.mubr.f32.gmra.mxu0 %v520
  %v787 = vpop.f32.mrf.mxu0
  %v788 = vadd.f32 0.0, %v787
  %v789 = vpop.f32.mrf.mxu0
  %790 = vmatprep.mubr.f32.mxu0 0.0
  %791 = vmatmul.mubr.f32.gmra.mxu0 %v669
  %v792 = vpop.f32.mrf.mxu0
  %v793 = vadd.f32 0.0, %v792
  %v794 = vpop.f32.mrf.mxu0
  %795 = vdwg.mxu0
  %v796 = vadd.f32 %v647, %v738
  %v797 = vadd.f32 %v648, %v743
  %v798 = vadd.f32 %v649, %v748
  %v799 = vadd.f32 %v650, %v753
  %v800 = vadd.f32 %v651, %v758
  %v801 = vadd.f32 %v652, %v763
  %v802 = vadd.f32 %v653, %v768
  %v803 = vadd.f32 %v654, %v773
  %v804 = vadd.f32 %v655, %v778
  %v805 = vadd.f32 %v656, %v783
  %v806 = vadd.f32 %v657, %v788
  %v807 = vadd.f32 %v658, %v793
  %v808 = vld [vmem:[%s2] sm:$0x1]
  %v810 = vlaneseq
  %v811 = vshrl.u32 %v810, 7
  %v812 = vsub.s32 0, %v811
  %v813 = vrot.slane %v808, %v812
  %v815 = vadd.f32 %v796, %v813
  %v816 = vadd.f32 %v797, %v813
  %v817 = vadd.f32 %v798, %v813
  %v818 = vadd.f32 %v799, %v813
  %v819 = vadd.f32 %v800, %v813
  %v820 = vadd.f32 %v801, %v813
  %v821 = vadd.f32 %v802, %v813
  %v822 = vadd.f32 %v803, %v813
  %v823 = vadd.f32 %v804, %v813
  %v824 = vadd.f32 %v805, %v813
  %v825 = vadd.f32 %v806, %v813
  %v826 = vadd.f32 %v807, %v813
  %v827 = vmax.f32 %v815, 0.0
  %v828 = vmax.f32 %v816, 0.0
  %v829 = vmax.f32 %v817, 0.0
  %v830 = vmax.f32 %v818, 0.0
  %v831 = vmax.f32 %v819, 0.0
  %v832 = vmax.f32 %v820, 0.0
  %v833 = vmax.f32 %v821, 0.0
  %v834 = vmax.f32 %v822, 0.0
  %v835 = vmax.f32 %v823, 0.0
  %v836 = vmax.f32 %v824, 0.0
  %v837 = vmax.f32 %v825, 0.0
  %v838 = vmax.f32 %v826, 0.0
  %v839 = vld [vmem:[%s3] sm:$0xff]
  %v840 = vld [vmem:[%s3 + $0x8] sm:$0xff]
  %v841 = vld [vmem:[%s3 + $0x10] sm:$0xff]
  %s842 = scalar_lea.vmem %s3, 24
  %v843 = vld [vmem:[%s842] sm:$0xff]
  %v844 = vld [vmem:[%s842 + $0x8] sm:$0xff]
  %v845 = vld [vmem:[%s842 + $0x10] sm:$0xff]
  %vm846 = vcmask 195584
  %v848 = vsel %vm846, %v828, 0
  %v851 = vsel %vm846, %v829, 0
  %v854 = vsel %vm846, %v830, 0
  %v857 = vsel %vm846, %v831, 0
  %v860 = vsel %vm846, %v832, 0
  %v863 = vsel %vm846, %v833, 0
  %v866 = vsel %vm846, %v834, 0
  %v869 = vsel %vm846, %v835, 0
  %871 = vmatprep.subr.mxu0 0.0
  %872 = vmatpush1.msra.mxu0 0.0
  %873 = vmatprep.subr.mxu0 0.0
  %874 = vmatpush1.msra.mxu0 0.0
  %875 = vmatprep.subr.mxu0 0.0
  %876 = vmatpush1.msra.mxu0 0.0
  %877 = vmatprep.subr.mxu0 0.0
  %878 = vmatpush1.msra.mxu0 0.0
  %879 = vmatprep.subr.mxu0 0.0
  %880 = vmatpush1.msra.mxu0 0.0
  %881 = vmatprep.subr.mxu0 0.0
  %882 = vmatpush1.msra.mxu0 0.0
  %883 = vmatprep.subr.mxu0 0.0
  %884 = vmatpush1.msra.mxu0 0.0
  %885 = vmatprep.subr.mxu0 0.0
  %886 = vmatpush1.msra.mxu0 0.0
  %887 = vmatprep.subr.mxu0 0.0
  %888 = vmatpush1.msra.mxu0 0.0
  %889 = vmatprep.subr.mxu0 0.0
  %890 = vmatpush1.msra.mxu0 0.0
  %891 = vmatprep.subr.mxu0 0.0
  %892 = vmatpush1.msra.mxu0 0.0
  %893 = vmatprep.subr.mxu0 0.0
  %894 = vmatpush1.msra.mxu0 0.0
  %895 = vmatprep.subr.mxu0 0.0
  %896 = vmatpush1.msra.mxu0 0.0
  %897 = vmatprep.subr.mxu0 0.0
  %898 = vmatpush1.msra.mxu0 %v845
  %899 = vmatprep.subr.mxu0 0.0
  %900 = vmatpush1.msra.mxu0 %v844
  %901 = vmatprep.subr.mxu0 0.0
  %902 = vmatpush1.msra.mxu0 %v843
  %903 = vmatprep.subr.mxu0 0.0
  %904 = vmatpush2.msra.mxu0 0.0
  %905 = vmatprep.subr.mxu0 0.0
  %906 = vmatpush2.msra.mxu0 0.0
  %907 = vmatprep.subr.mxu0 0.0
  %908 = vmatpush2.msra.mxu0 0.0
  %909 = vmatprep.subr.mxu0 0.0
  %910 = vmatpush2.msra.mxu0 0.0
  %911 = vmatprep.subr.mxu0 0.0
  %912 = vmatpush2.msra.mxu0 0.0
  %913 = vmatprep.subr.mxu0 0.0
  %914 = vmatpush2.msra.mxu0 0.0
  %915 = vmatprep.subr.mxu0 0.0
  %916 = vmatpush2.msra.mxu0 0.0
  %917 = vmatprep.subr.mxu0 0.0
  %918 = vmatpush2.msra.mxu0 0.0
  %919 = vmatprep.subr.mxu0 0.0
  %920 = vmatpush2.msra.mxu0 0.0
  %921 = vmatprep.subr.mxu0 0.0
  %922 = vmatpush2.msra.mxu0 0.0
  %923 = vmatprep.subr.mxu0 0.0
  %924 = vmatpush2.msra.mxu0 0.0
  %925 = vmatprep.subr.mxu0 0.0
  %926 = vmatpush2.msra.mxu0 0.0
  %927 = vmatprep.subr.mxu0 0.0
  %928 = vmatpush2.msra.mxu0 0.0
  %929 = vmatprep.subr.mxu0 0.0
  %930 = vmatpush2.msra.mxu0 0.0
  %931 = vmatprep.subr.mxu0 0.0
  %932 = vmatpush2.msra.mxu0 0.0
  %933 = vmatprep.subr.mxu0 0.0
  %934 = vmatpush2.msra.mxu0 0.0
  %935 = vmatprep.mubr.f32.mxu0 0.0
  %936 = vmatmul.mubr.f32.gmra.mxu0 %v848
  %v937 = vpop.f32.mrf.mxu0
  %v938 = vadd.f32 0.0, %v937
  %v939 = vpop.f32.mrf.mxu0
  %940 = vmatprep.mubr.f32.mxu0 0.0
  %941 = vmatmul.mubr.f32.gmra.mxu0 %v851
  %v942 = vpop.f32.mrf.mxu0
  %v943 = vadd.f32 0.0, %v942
  %v944 = vpop.f32.mrf.mxu0
  %945 = vmatprep.mubr.f32.mxu0 0.0
  %946 = vmatmul.mubr.f32.gmra.mxu0 %v854
  %v947 = vpop.f32.mrf.mxu0
  %v948 = vadd.f32 0.0, %v947
  %v949 = vpop.f32.mrf.mxu0
  %950 = vmatprep.mubr.f32.mxu0 0.0
  %951 = vmatmul.mubr.f32.gmra.mxu0 %v857
  %v952 = vpop.f32.mrf.mxu0
  %v953 = vadd.f32 0.0, %v952
  %v954 = vpop.f32.mrf.mxu0
  %955 = vmatprep.mubr.f32.mxu0 0.0
  %956 = vmatmul.mubr.f32.gmra.mxu0 %v860
  %v957 = vpop.f32.mrf.mxu0
  %v958 = vadd.f32 0.0, %v957
  %v959 = vpop.f32.mrf.mxu0
  %960 = vmatprep.mubr.f32.mxu0 0.0
  %961 = vmatmul.mubr.f32.gmra.mxu0 %v863
  %v962 = vpop.f32.mrf.mxu0
  %v963 = vadd.f32 0.0, %v962
  %v964 = vpop.f32.mrf.mxu0
  %965 = vmatprep.mubr.f32.mxu0 0.0
  %966 = vmatmul.mubr.f32.gmra.mxu0 %v866
  %v967 = vpop.f32.mrf.mxu0
  %v968 = vadd.f32 0.0, %v967
  %v969 = vpop.f32.mrf.mxu0
  %970 = vmatprep.mubr.f32.mxu0 0.0
  %971 = vmatmul.mubr.f32.gmra.mxu0 %v869
  %v972 = vpop.f32.mrf.mxu0
  %v973 = vadd.f32 0.0, %v972
  %v974 = vpop.f32.mrf.mxu0
  %975 = vdwg.mxu0
  %v977 = vsel %vm846, %v827, 0
  %979 = vmatprep.subr.mxu0 0.0
  %980 = vmatpush1.msra.mxu0 0.0
  %981 = vmatprep.subr.mxu0 0.0
  %982 = vmatpush1.msra.mxu0 0.0
  %983 = vmatprep.subr.mxu0 0.0
  %984 = vmatpush1.msra.mxu0 0.0
  %985 = vmatprep.subr.mxu0 0.0
  %986 = vmatpush1.msra.mxu0 0.0
  %987 = vmatprep.subr.mxu0 0.0
  %988 = vmatpush1.msra.mxu0 0.0
  %989 = vmatprep.subr.mxu0 0.0
  %990 = vmatpush1.msra.mxu0 0.0
  %991 = vmatprep.subr.mxu0 0.0
  %992 = vmatpush1.msra.mxu0 0.0
  %993 = vmatprep.subr.mxu0 0.0
  %994 = vmatpush1.msra.mxu0 0.0
  %995 = vmatprep.subr.mxu0 0.0
  %996 = vmatpush1.msra.mxu0 0.0
  %997 = vmatprep.subr.mxu0 0.0
  %998 = vmatpush1.msra.mxu0 0.0
  %999 = vmatprep.subr.mxu0 0.0
  %1000 = vmatpush1.msra.mxu0 0.0
  %1001 = vmatprep.subr.mxu0 0.0
  %1002 = vmatpush1.msra.mxu0 0.0
  %1003 = vmatprep.subr.mxu0 0.0
  %1004 = vmatpush1.msra.mxu0 0.0
  %1005 = vmatprep.subr.mxu0 0.0
  %1006 = vmatpush1.msra.mxu0 %v841
  %1007 = vmatprep.subr.mxu0 0.0
  %1008 = vmatpush1.msra.mxu0 %v840
  %1009 = vmatprep.subr.mxu0 0.0
  %1010 = vmatpush1.msra.mxu0 %v839
  %1011 = vmatprep.subr.mxu0 0.0
  %1012 = vmatpush2.msra.mxu0 0.0
  %1013 = vmatprep.subr.mxu0 0.0
  %1014 = vmatpush2.msra.mxu0 0.0
  %1015 = vmatprep.subr.mxu0 0.0
  %1016 = vmatpush2.msra.mxu0 0.0
  %1017 = vmatprep.subr.mxu0 0.0
  %1018 = vmatpush2.msra.mxu0 0.0
  %1019 = vmatprep.subr.mxu0 0.0
  %1020 = vmatpush2.msra.mxu0 0.0
  %1021 = vmatprep.subr.mxu0 0.0
  %1022 = vmatpush2.msra.mxu0 0.0
  %1023 = vmatprep.subr.mxu0 0.0
  %1024 = vmatpush2.msra.mxu0 0.0
  %1025 = vmatprep.subr.mxu0 0.0
  %1026 = vmatpush2.msra.mxu0 0.0
  %1027 = vmatprep.subr.mxu0 0.0
  %1028 = vmatpush2.msra.mxu0 0.0
  %1029 = vmatprep.subr.mxu0 0.0
  %1030 = vmatpush2.msra.mxu0 0.0
  %1031 = vmatprep.subr.mxu0 0.0
  %1032 = vmatpush2.msra.mxu0 0.0
  %1033 = vmatprep.subr.mxu0 0.0
  %1034 = vmatpush2.msra.mxu0 0.0
  %1035 = vmatprep.subr.mxu0 0.0
  %1036 = vmatpush2.msra.mxu0 0.0
  %1037 = vmatprep.subr.mxu0 0.0
  %1038 = vmatpush2.msra.mxu0 0.0
  %1039 = vmatprep.subr.mxu0 0.0
  %1040 = vmatpush2.msra.mxu0 0.0
  %1041 = vmatprep.subr.mxu0 0.0
  %1042 = vmatpush2.msra.mxu0 0.0
  %1043 = vmatprep.mubr.f32.mxu0 0.0
  %1044 = vmatmul.mubr.f32.gmra.mxu0 %v977
  %v1045 = vpop.f32.mrf.mxu0
  %v1046 = vadd.f32 %v938, %v1045
  %v1047 = vpop.f32.mrf.mxu0
  %1048 = vmatprep.mubr.f32.mxu0 0.0
  %1049 = vmatmul.mubr.f32.gmra.mxu0 %v848
  %v1050 = vpop.f32.mrf.mxu0
  %v1051 = vadd.f32 %v943, %v1050
  %v1052 = vpop.f32.mrf.mxu0
  %1053 = vmatprep.mubr.f32.mxu0 0.0
  %1054 = vmatmul.mubr.f32.gmra.mxu0 %v851
  %v1055 = vpop.f32.mrf.mxu0
  %v1056 = vadd.f32 %v948, %v1055
  %v1057 = vpop.f32.mrf.mxu0
  %1058 = vmatprep.mubr.f32.mxu0 0.0
  %1059 = vmatmul.mubr.f32.gmra.mxu0 %v854
  %v1060 = vpop.f32.mrf.mxu0
  %v1061 = vadd.f32 %v953, %v1060
  %v1062 = vpop.f32.mrf.mxu0
  %1063 = vmatprep.mubr.f32.mxu0 0.0
  %1064 = vmatmul.mubr.f32.gmra.mxu0 %v857
  %v1065 = vpop.f32.mrf.mxu0
  %v1066 = vadd.f32 %v958, %v1065
  %v1067 = vpop.f32.mrf.mxu0
  %1068 = vmatprep.mubr.f32.mxu0 0.0
  %1069 = vmatmul.mubr.f32.gmra.mxu0 %v860
  %v1070 = vpop.f32.mrf.mxu0
  %v1071 = vadd.f32 %v963, %v1070
  %v1072 = vpop.f32.mrf.mxu0
  %1073 = vmatprep.mubr.f32.mxu0 0.0
  %1074 = vmatmul.mubr.f32.gmra.mxu0 %v863
  %v1075 = vpop.f32.mrf.mxu0
  %v1076 = vadd.f32 %v968, %v1075
  %v1077 = vpop.f32.mrf.mxu0
  %1078 = vmatprep.mubr.f32.mxu0 0.0
  %1079 = vmatmul.mubr.f32.gmra.mxu0 %v866
  %v1080 = vpop.f32.mrf.mxu0
  %v1081 = vadd.f32 %v973, %v1080
  %v1082 = vpop.f32.mrf.mxu0
  %1083 = vdwg.mxu0
  %s1084 = scalar_lea.vmem %s3, 48
  %v1085 = vld [vmem:[%s1084] sm:$0xff]
  %v1086 = vld [vmem:[%s1084 + $0x8] sm:$0xff]
  %v1087 = vld [vmem:[%s1084 + $0x10] sm:$0xff]
  %v1089 = vsel %vm846, %v836, 0
  %1091 = vmatprep.subr.mxu0 0.0
  %1092 = vmatpush1.msra.mxu0 0.0
  %1093 = vmatprep.subr.mxu0 0.0
  %1094 = vmatpush1.msra.mxu0 0.0
  %1095 = vmatprep.subr.mxu0 0.0
  %1096 = vmatpush1.msra.mxu0 0.0
  %1097 = vmatprep.subr.mxu0 0.0
  %1098 = vmatpush1.msra.mxu0 0.0
  %1099 = vmatprep.subr.mxu0 0.0
  %1100 = vmatpush1.msra.mxu0 0.0
  %1101 = vmatprep.subr.mxu0 0.0
  %1102 = vmatpush1.msra.mxu0 0.0
  %1103 = vmatprep.subr.mxu0 0.0
  %1104 = vmatpush1.msra.mxu0 0.0
  %1105 = vmatprep.subr.mxu0 0.0
  %1106 = vmatpush1.msra.mxu0 0.0
  %1107 = vmatprep.subr.mxu0 0.0
  %1108 = vmatpush1.msra.mxu0 0.0
  %1109 = vmatprep.subr.mxu0 0.0
  %1110 = vmatpush1.msra.mxu0 0.0
  %1111 = vmatprep.subr.mxu0 0.0
  %1112 = vmatpush1.msra.mxu0 0.0
  %1113 = vmatprep.subr.mxu0 0.0
  %1114 = vmatpush1.msra.mxu0 0.0
  %1115 = vmatprep.subr.mxu0 0.0
  %1116 = vmatpush1.msra.mxu0 0.0
  %1117 = vmatprep.subr.mxu0 0.0
  %1118 = vmatpush1.msra.mxu0 %v1087
  %1119 = vmatprep.subr.mxu0 0.0
  %1120 = vmatpush1.msra.mxu0 %v1086
  %1121 = vmatprep.subr.mxu0 0.0
  %1122 = vmatpush1.msra.mxu0 %v1085
  %1123 = vmatprep.subr.mxu0 0.0
  %1124 = vmatpush2.msra.mxu0 0.0
  %1125 = vmatprep.subr.mxu0 0.0
  %1126 = vmatpush2.msra.mxu0 0.0
  %1127 = vmatprep.subr.mxu0 0.0
  %1128 = vmatpush2.msra.mxu0 0.0
  %1129 = vmatprep.subr.mxu0 0.0
  %1130 = vmatpush2.msra.mxu0 0.0
  %1131 = vmatprep.subr.mxu0 0.0
  %1132 = vmatpush2.msra.mxu0 0.0
  %1133 = vmatprep.subr.mxu0 0.0
  %1134 = vmatpush2.msra.mxu0 0.0
  %1135 = vmatprep.subr.mxu0 0.0
  %1136 = vmatpush2.msra.mxu0 0.0
  %1137 = vmatprep.subr.mxu0 0.0
  %1138 = vmatpush2.msra.mxu0 0.0
  %1139 = vmatprep.subr.mxu0 0.0
  %1140 = vmatpush2.msra.mxu0 0.0
  %1141 = vmatprep.subr.mxu0 0.0
  %1142 = vmatpush2.msra.mxu0 0.0
  %1143 = vmatprep.subr.mxu0 0.0
  %1144 = vmatpush2.msra.mxu0 0.0
  %1145 = vmatprep.subr.mxu0 0.0
  %1146 = vmatpush2.msra.mxu0 0.0
  %1147 = vmatprep.subr.mxu0 0.0
  %1148 = vmatpush2.msra.mxu0 0.0
  %1149 = vmatprep.subr.mxu0 0.0
  %1150 = vmatpush2.msra.mxu0 0.0
  %1151 = vmatprep.subr.mxu0 0.0
  %1152 = vmatpush2.msra.mxu0 0.0
  %1153 = vmatprep.subr.mxu0 0.0
  %1154 = vmatpush2.msra.mxu0 0.0
  %1155 = vmatprep.mubr.f32.mxu0 0.0
  %1156 = vmatmul.mubr.f32.gmra.mxu0 %v851
  %v1157 = vpop.f32.mrf.mxu0
  %v1158 = vadd.f32 0.0, %v1157
  %v1159 = vpop.f32.mrf.mxu0
  %1160 = vmatprep.mubr.f32.mxu0 0.0
  %1161 = vmatmul.mubr.f32.gmra.mxu0 %v854
  %v1162 = vpop.f32.mrf.mxu0
  %v1163 = vadd.f32 0.0, %v1162
  %v1164 = vpop.f32.mrf.mxu0
  %1165 = vmatprep.mubr.f32.mxu0 0.0
  %1166 = vmatmul.mubr.f32.gmra.mxu0 %v857
  %v1167 = vpop.f32.mrf.mxu0
  %v1168 = vadd.f32 0.0, %v1167
  %v1169 = vpop.f32.mrf.mxu0
  %1170 = vmatprep.mubr.f32.mxu0 0.0
  %1171 = vmatmul.mubr.f32.gmra.mxu0 %v860
  %v1172 = vpop.f32.mrf.mxu0
  %v1173 = vadd.f32 0.0, %v1172
  %v1174 = vpop.f32.mrf.mxu0
  %1175 = vmatprep.mubr.f32.mxu0 0.0
  %1176 = vmatmul.mubr.f32.gmra.mxu0 %v863
  %v1177 = vpop.f32.mrf.mxu0
  %v1178 = vadd.f32 0.0, %v1177
  %v1179 = vpop.f32.mrf.mxu0
  %1180 = vmatprep.mubr.f32.mxu0 0.0
  %1181 = vmatmul.mubr.f32.gmra.mxu0 %v866
  %v1182 = vpop.f32.mrf.mxu0
  %v1183 = vadd.f32 0.0, %v1182
  %v1184 = vpop.f32.mrf.mxu0
  %1185 = vmatprep.mubr.f32.mxu0 0.0
  %1186 = vmatmul.mubr.f32.gmra.mxu0 %v869
  %v1187 = vpop.f32.mrf.mxu0
  %v1188 = vadd.f32 0.0, %v1187
  %v1189 = vpop.f32.mrf.mxu0
  %1190 = vmatprep.mubr.f32.mxu0 0.0
  %1191 = vmatmul.mubr.f32.gmra.mxu0 %v1089
  %v1192 = vpop.f32.mrf.mxu0
  %v1193 = vadd.f32 0.0, %v1192
  %v1194 = vpop.f32.mrf.mxu0
  %1195 = vdwg.mxu0
  %v1196 = vadd.f32 %v1046, %v1158
  %v1197 = vadd.f32 %v1051, %v1163
  %v1198 = vadd.f32 %v1056, %v1168
  %v1199 = vadd.f32 %v1061, %v1173
  %v1200 = vadd.f32 %v1066, %v1178
  %v1201 = vadd.f32 %v1071, %v1183
  %v1202 = vadd.f32 %v1076, %v1188
  %v1203 = vadd.f32 %v1081, %v1193
  %s1204 = scalar_lea.vmem %s3, 72
  %v1205 = vld [vmem:[%s1204] sm:$0xff]
  %v1206 = vld [vmem:[%s1204 + $0x8] sm:$0xff]
  %v1207 = vld [vmem:[%s1204 + $0x10] sm:$0xff]
  %v1209 = vsel %vm846, %v837, 0
  %1211 = vmatprep.subr.mxu0 0.0
  %1212 = vmatpush1.msra.mxu0 0.0
  %1213 = vmatprep.subr.mxu0 0.0
  %1214 = vmatpush1.msra.mxu0 0.0
  %1215 = vmatprep.subr.mxu0 0.0
  %1216 = vmatpush1.msra.mxu0 0.0
  %1217 = vmatprep.subr.mxu0 0.0
  %1218 = vmatpush1.msra.mxu0 0.0
  %1219 = vmatprep.subr.mxu0 0.0
  %1220 = vmatpush1.msra.mxu0 0.0
  %1221 = vmatprep.subr.mxu0 0.0
  %1222 = vmatpush1.msra.mxu0 0.0
  %1223 = vmatprep.subr.mxu0 0.0
  %1224 = vmatpush1.msra.mxu0 0.0
  %1225 = vmatprep.subr.mxu0 0.0
  %1226 = vmatpush1.msra.mxu0 0.0
  %1227 = vmatprep.subr.mxu0 0.0
  %1228 = vmatpush1.msra.mxu0 0.0
  %1229 = vmatprep.subr.mxu0 0.0
  %1230 = vmatpush1.msra.mxu0 0.0
  %1231 = vmatprep.subr.mxu0 0.0
  %1232 = vmatpush1.msra.mxu0 0.0
  %1233 = vmatprep.subr.mxu0 0.0
  %1234 = vmatpush1.msra.mxu0 0.0
  %1235 = vmatprep.subr.mxu0 0.0
  %1236 = vmatpush1.msra.mxu0 0.0
  %1237 = vmatprep.subr.mxu0 0.0
  %1238 = vmatpush1.msra.mxu0 %v1207
  %1239 = vmatprep.subr.mxu0 0.0
  %1240 = vmatpush1.msra.mxu0 %v1206
  %1241 = vmatprep.subr.mxu0 0.0
  %1242 = vmatpush1.msra.mxu0 %v1205
  %1243 = vmatprep.subr.mxu0 0.0
  %1244 = vmatpush2.msra.mxu0 0.0
  %1245 = vmatprep.subr.mxu0 0.0
  %1246 = vmatpush2.msra.mxu0 0.0
  %1247 = vmatprep.subr.mxu0 0.0
  %1248 = vmatpush2.msra.mxu0 0.0
  %1249 = vmatprep.subr.mxu0 0.0
  %1250 = vmatpush2.msra.mxu0 0.0
  %1251 = vmatprep.subr.mxu0 0.0
  %1252 = vmatpush2.msra.mxu0 0.0
  %1253 = vmatprep.subr.mxu0 0.0
  %1254 = vmatpush2.msra.mxu0 0.0
  %1255 = vmatprep.subr.mxu0 0.0
  %1256 = vmatpush2.msra.mxu0 0.0
  %1257 = vmatprep.subr.mxu0 0.0
  %1258 = vmatpush2.msra.mxu0 0.0
  %1259 = vmatprep.subr.mxu0 0.0
  %1260 = vmatpush2.msra.mxu0 0.0
  %1261 = vmatprep.subr.mxu0 0.0
  %1262 = vmatpush2.msra.mxu0 0.0
  %1263 = vmatprep.subr.mxu0 0.0
  %1264 = vmatpush2.msra.mxu0 0.0
  %1265 = vmatprep.subr.mxu0 0.0
  %1266 = vmatpush2.msra.mxu0 0.0
  %1267 = vmatprep.subr.mxu0 0.0
  %1268 = vmatpush2.msra.mxu0 0.0
  %1269 = vmatprep.subr.mxu0 0.0
  %1270 = vmatpush2.msra.mxu0 0.0
  %1271 = vmatprep.subr.mxu0 0.0
  %1272 = vmatpush2.msra.mxu0 0.0
  %1273 = vmatprep.subr.mxu0 0.0
  %1274 = vmatpush2.msra.mxu0 0.0
  %1275 = vmatprep.mubr.f32.mxu0 0.0
  %1276 = vmatmul.mubr.f32.gmra.mxu0 %v854
  %v1277 = vpop.f32.mrf.mxu0
  %v1278 = vadd.f32 0.0, %v1277
  %v1279 = vpop.f32.mrf.mxu0
  %1280 = vmatprep.mubr.f32.mxu0 0.0
  %1281 = vmatmul.mubr.f32.gmra.mxu0 %v857
  %v1282 = vpop.f32.mrf.mxu0
  %v1283 = vadd.f32 0.0, %v1282
  %v1284 = vpop.f32.mrf.mxu0
  %1285 = vmatprep.mubr.f32.mxu0 0.0
  %1286 = vmatmul.mubr.f32.gmra.mxu0 %v860
  %v1287 = vpop.f32.mrf.mxu0
  %v1288 = vadd.f32 0.0, %v1287
  %v1289 = vpop.f32.mrf.mxu0
  %1290 = vmatprep.mubr.f32.mxu0 0.0
  %1291 = vmatmul.mubr.f32.gmra.mxu0 %v863
  %v1292 = vpop.f32.mrf.mxu0
  %v1293 = vadd.f32 0.0, %v1292
  %v1294 = vpop.f32.mrf.mxu0
  %1295 = vmatprep.mubr.f32.mxu0 0.0
  %1296 = vmatmul.mubr.f32.gmra.mxu0 %v866
  %v1297 = vpop.f32.mrf.mxu0
  %v1298 = vadd.f32 0.0, %v1297
  %v1299 = vpop.f32.mrf.mxu0
  %1300 = vmatprep.mubr.f32.mxu0 0.0
  %1301 = vmatmul.mubr.f32.gmra.mxu0 %v869
  %v1302 = vpop.f32.mrf.mxu0
  %v1303 = vadd.f32 0.0, %v1302
  %v1304 = vpop.f32.mrf.mxu0
  %1305 = vmatprep.mubr.f32.mxu0 0.0
  %1306 = vmatmul.mubr.f32.gmra.mxu0 %v1089
  %v1307 = vpop.f32.mrf.mxu0
  %v1308 = vadd.f32 0.0, %v1307
  %v1309 = vpop.f32.mrf.mxu0
  %1310 = vmatprep.mubr.f32.mxu0 0.0
  %1311 = vmatmul.mubr.f32.gmra.mxu0 %v1209
  %v1312 = vpop.f32.mrf.mxu0
  %v1313 = vadd.f32 0.0, %v1312
  %v1314 = vpop.f32.mrf.mxu0
  %1315 = vdwg.mxu0
  %v1316 = vadd.f32 %v1196, %v1278
  %v1317 = vadd.f32 %v1197, %v1283
  %v1318 = vadd.f32 %v1198, %v1288
  %v1319 = vadd.f32 %v1199, %v1293
  %v1320 = vadd.f32 %v1200, %v1298
  %v1321 = vadd.f32 %v1201, %v1303
  %v1322 = vadd.f32 %v1202, %v1308
  %v1323 = vadd.f32 %v1203, %v1313
  %s1324 = scalar_lea.vmem %s3, 96
  %v1325 = vld [vmem:[%s1324] sm:$0xff]
  %v1326 = vld [vmem:[%s1324 + $0x8] sm:$0xff]
  %v1327 = vld [vmem:[%s1324 + $0x10] sm:$0xff]
  %v1329 = vsel %vm846, %v838, 0
  %1331 = vmatprep.subr.mxu0 0.0
  %1332 = vmatpush1.msra.mxu0 0.0
  %1333 = vmatprep.subr.mxu0 0.0
  %1334 = vmatpush1.msra.mxu0 0.0
  %1335 = vmatprep.subr.mxu0 0.0
  %1336 = vmatpush1.msra.mxu0 0.0
  %1337 = vmatprep.subr.mxu0 0.0
  %1338 = vmatpush1.msra.mxu0 0.0
  %1339 = vmatprep.subr.mxu0 0.0
  %1340 = vmatpush1.msra.mxu0 0.0
  %1341 = vmatprep.subr.mxu0 0.0
  %1342 = vmatpush1.msra.mxu0 0.0
  %1343 = vmatprep.subr.mxu0 0.0
  %1344 = vmatpush1.msra.mxu0 0.0
  %1345 = vmatprep.subr.mxu0 0.0
  %1346 = vmatpush1.msra.mxu0 0.0
  %1347 = vmatprep.subr.mxu0 0.0
  %1348 = vmatpush1.msra.mxu0 0.0
  %1349 = vmatprep.subr.mxu0 0.0
  %1350 = vmatpush1.msra.mxu0 0.0
  %1351 = vmatprep.subr.mxu0 0.0
  %1352 = vmatpush1.msra.mxu0 0.0
  %1353 = vmatprep.subr.mxu0 0.0
  %1354 = vmatpush1.msra.mxu0 0.0
  %1355 = vmatprep.subr.mxu0 0.0
  %1356 = vmatpush1.msra.mxu0 0.0
  %1357 = vmatprep.subr.mxu0 0.0
  %1358 = vmatpush1.msra.mxu0 %v1327
  %1359 = vmatprep.subr.mxu0 0.0
  %1360 = vmatpush1.msra.mxu0 %v1326
  %1361 = vmatprep.subr.mxu0 0.0
  %1362 = vmatpush1.msra.mxu0 %v1325
  %1363 = vmatprep.subr.mxu0 0.0
  %1364 = vmatpush2.msra.mxu0 0.0
  %1365 = vmatprep.subr.mxu0 0.0
  %1366 = vmatpush2.msra.mxu0 0.0
  %1367 = vmatprep.subr.mxu0 0.0
  %1368 = vmatpush2.msra.mxu0 0.0
  %1369 = vmatprep.subr.mxu0 0.0
  %1370 = vmatpush2.msra.mxu0 0.0
  %1371 = vmatprep.subr.mxu0 0.0
  %1372 = vmatpush2.msra.mxu0 0.0
  %1373 = vmatprep.subr.mxu0 0.0
  %1374 = vmatpush2.msra.mxu0 0.0
  %1375 = vmatprep.subr.mxu0 0.0
  %1376 = vmatpush2.msra.mxu0 0.0
  %1377 = vmatprep.subr.mxu0 0.0
  %1378 = vmatpush2.msra.mxu0 0.0
  %1379 = vmatprep.subr.mxu0 0.0
  %1380 = vmatpush2.msra.mxu0 0.0
  %1381 = vmatprep.subr.mxu0 0.0
  %1382 = vmatpush2.msra.mxu0 0.0
  %1383 = vmatprep.subr.mxu0 0.0
  %1384 = vmatpush2.msra.mxu0 0.0
  %1385 = vmatprep.subr.mxu0 0.0
  %1386 = vmatpush2.msra.mxu0 0.0
  %1387 = vmatprep.subr.mxu0 0.0
  %1388 = vmatpush2.msra.mxu0 0.0
  %1389 = vmatprep.subr.mxu0 0.0
  %1390 = vmatpush2.msra.mxu0 0.0
  %1391 = vmatprep.subr.mxu0 0.0
  %1392 = vmatpush2.msra.mxu0 0.0
  %1393 = vmatprep.subr.mxu0 0.0
  %1394 = vmatpush2.msra.mxu0 0.0
  %1395 = vmatprep.mubr.f32.mxu0 0.0
  %1396 = vmatmul.mubr.f32.gmra.mxu0 %v857
  %v1397 = vpop.f32.mrf.mxu0
  %v1398 = vadd.f32 0.0, %v1397
  %v1399 = vpop.f32.mrf.mxu0
  %1400 = vmatprep.mubr.f32.mxu0 0.0
  %1401 = vmatmul.mubr.f32.gmra.mxu0 %v860
  %v1402 = vpop.f32.mrf.mxu0
  %v1403 = vadd.f32 0.0, %v1402
  %v1404 = vpop.f32.mrf.mxu0
  %1405 = vmatprep.mubr.f32.mxu0 0.0
  %1406 = vmatmul.mubr.f32.gmra.mxu0 %v863
  %v1407 = vpop.f32.mrf.mxu0
  %v1408 = vadd.f32 0.0, %v1407
  %v1409 = vpop.f32.mrf.mxu0
  %1410 = vmatprep.mubr.f32.mxu0 0.0
  %1411 = vmatmul.mubr.f32.gmra.mxu0 %v866
  %v1412 = vpop.f32.mrf.mxu0
  %v1413 = vadd.f32 0.0, %v1412
  %v1414 = vpop.f32.mrf.mxu0
  %1415 = vmatprep.mubr.f32.mxu0 0.0
  %1416 = vmatmul.mubr.f32.gmra.mxu0 %v869
  %v1417 = vpop.f32.mrf.mxu0
  %v1418 = vadd.f32 0.0, %v1417
  %v1419 = vpop.f32.mrf.mxu0
  %1420 = vmatprep.mubr.f32.mxu0 0.0
  %1421 = vmatmul.mubr.f32.gmra.mxu0 %v1089
  %v1422 = vpop.f32.mrf.mxu0
  %v1423 = vadd.f32 0.0, %v1422
  %v1424 = vpop.f32.mrf.mxu0
  %1425 = vmatprep.mubr.f32.mxu0 0.0
  %1426 = vmatmul.mubr.f32.gmra.mxu0 %v1209
  %v1427 = vpop.f32.mrf.mxu0
  %v1428 = vadd.f32 0.0, %v1427
  %v1429 = vpop.f32.mrf.mxu0
  %1430 = vmatprep.mubr.f32.mxu0 0.0
  %1431 = vmatmul.mubr.f32.gmra.mxu0 %v1329
  %v1432 = vpop.f32.mrf.mxu0
  %v1433 = vadd.f32 0.0, %v1432
  %v1434 = vpop.f32.mrf.mxu0
  %1435 = vdwg.mxu0
  %v1436 = vadd.f32 %v1316, %v1398
  %v1437 = vadd.f32 %v1317, %v1403
  %v1438 = vadd.f32 %v1318, %v1408
  %v1439 = vadd.f32 %v1319, %v1413
  %v1440 = vadd.f32 %v1320, %v1418
  %v1441 = vadd.f32 %v1321, %v1423
  %v1442 = vadd.f32 %v1322, %v1428
  %v1443 = vadd.f32 %v1323, %v1433
  %v1444 = vld [vmem:[%s4] sm:$0x1]
  %v1446 = vlaneseq
  %v1447 = vshrl.u32 %v1446, 7
  %v1448 = vsub.s32 0, %v1447
  %v1449 = vrot.slane %v1444, %v1448
  %v1451 = vadd.f32 %v1436, %v1449
  %v1452 = vadd.f32 %v1437, %v1449
  %v1453 = vadd.f32 %v1438, %v1449
  %v1454 = vadd.f32 %v1439, %v1449
  %v1455 = vadd.f32 %v1440, %v1449
  %v1456 = vadd.f32 %v1441, %v1449
  %v1457 = vadd.f32 %v1442, %v1449
  %v1458 = vadd.f32 %v1443, %v1449
  %v1459 = vmax.f32 %v1451, 0.0
  %v1460 = vmax.f32 %v1452, 0.0
  %v1461 = vmax.f32 %v1453, 0.0
  %v1462 = vmax.f32 %v1454, 0.0
  %v1463 = vmax.f32 %v1455, 0.0
  %v1464 = vmax.f32 %v1456, 0.0
  %v1465 = vmax.f32 %v1457, 0.0
  %v1466 = vmax.f32 %v1458, 0.0
  %v1467 = vld [vmem:[%s5] sm:$0xff]
  %v1468 = vld [vmem:[%s5 + $0x8] sm:$0xff]
  %s1469 = scalar_lea.vmem %s5, 16
  %v1470 = vld [vmem:[%s1469] sm:$0xff]
  %v1471 = vld [vmem:[%s1469 + $0x8] sm:$0xff]
  %vm1472 = vcmask 130048
  %v1474 = vsel %vm1472, %v1460, 0
  %v1477 = vsel %vm1472, %v1461, 0
  %v1480 = vsel %vm1472, %v1462, 0
  %v1483 = vsel %vm1472, %v1463, 0
  %1485 = vmatprep.subr.mxu0 0.0
  %1486 = vmatpush1.msra.mxu0 0.0
  %1487 = vmatprep.subr.mxu0 0.0
  %1488 = vmatpush1.msra.mxu0 0.0
  %1489 = vmatprep.subr.mxu0 0.0
  %1490 = vmatpush1.msra.mxu0 0.0
  %1491 = vmatprep.subr.mxu0 0.0
  %1492 = vmatpush1.msra.mxu0 0.0
  %1493 = vmatprep.subr.mxu0 0.0
  %1494 = vmatpush1.msra.mxu0 0.0
  %1495 = vmatprep.subr.mxu0 0.0
  %1496 = vmatpush1.msra.mxu0 0.0
  %1497 = vmatprep.subr.mxu0 0.0
  %1498 = vmatpush1.msra.mxu0 0.0
  %1499 = vmatprep.subr.mxu0 0.0
  %1500 = vmatpush1.msra.mxu0 0.0
  %1501 = vmatprep.subr.mxu0 0.0
  %1502 = vmatpush1.msra.mxu0 0.0
  %1503 = vmatprep.subr.mxu0 0.0
  %1504 = vmatpush1.msra.mxu0 0.0
  %1505 = vmatprep.subr.mxu0 0.0
  %1506 = vmatpush1.msra.mxu0 0.0
  %1507 = vmatprep.subr.mxu0 0.0
  %1508 = vmatpush1.msra.mxu0 0.0
  %1509 = vmatprep.subr.mxu0 0.0
  %1510 = vmatpush1.msra.mxu0 0.0
  %1511 = vmatprep.subr.mxu0 0.0
  %1512 = vmatpush1.msra.mxu0 0.0
  %1513 = vmatprep.subr.mxu0 0.0
  %1514 = vmatpush1.msra.mxu0 %v1471
  %1515 = vmatprep.subr.mxu0 0.0
  %1516 = vmatpush1.msra.mxu0 %v1470
  %1517 = vmatprep.subr.mxu0 0.0
  %1518 = vmatpush2.msra.mxu0 0.0
  %1519 = vmatprep.subr.mxu0 0.0
  %1520 = vmatpush2.msra.mxu0 0.0
  %1521 = vmatprep.subr.mxu0 0.0
  %1522 = vmatpush2.msra.mxu0 0.0
  %1523 = vmatprep.subr.mxu0 0.0
  %1524 = vmatpush2.msra.mxu0 0.0
  %1525 = vmatprep.subr.mxu0 0.0
  %1526 = vmatpush2.msra.mxu0 0.0
  %1527 = vmatprep.subr.mxu0 0.0
  %1528 = vmatpush2.msra.mxu0 0.0
  %1529 = vmatprep.subr.mxu0 0.0
  %1530 = vmatpush2.msra.mxu0 0.0
  %1531 = vmatprep.subr.mxu0 0.0
  %1532 = vmatpush2.msra.mxu0 0.0
  %1533 = vmatprep.subr.mxu0 0.0
  %1534 = vmatpush2.msra.mxu0 0.0
  %1535 = vmatprep.subr.mxu0 0.0
  %1536 = vmatpush2.msra.mxu0 0.0
  %1537 = vmatprep.subr.mxu0 0.0
  %1538 = vmatpush2.msra.mxu0 0.0
  %1539 = vmatprep.subr.mxu0 0.0
  %1540 = vmatpush2.msra.mxu0 0.0
  %1541 = vmatprep.subr.mxu0 0.0
  %1542 = vmatpush2.msra.mxu0 0.0
  %1543 = vmatprep.subr.mxu0 0.0
  %1544 = vmatpush2.msra.mxu0 0.0
  %1545 = vmatprep.subr.mxu0 0.0
  %1546 = vmatpush2.msra.mxu0 0.0
  %1547 = vmatprep.subr.mxu0 0.0
  %1548 = vmatpush2.msra.mxu0 0.0
  %1549 = vmatprep.mubr.f32.mxu0 0.0
  %1550 = vmatmul.mubr.f32.gmra.mxu0 %v1474
  %v1551 = vpop.f32.mrf.mxu0
  %v1552 = vadd.f32 0.0, %v1551
  %v1553 = vpop.f32.mrf.mxu0
  %1554 = vmatprep.mubr.f32.mxu0 0.0
  %1555 = vmatmul.mubr.f32.gmra.mxu0 %v1477
  %v1556 = vpop.f32.mrf.mxu0
  %v1557 = vadd.f32 0.0, %v1556
  %v1558 = vpop.f32.mrf.mxu0
  %1559 = vmatprep.mubr.f32.mxu0 0.0
  %1560 = vmatmul.mubr.f32.gmra.mxu0 %v1480
  %v1561 = vpop.f32.mrf.mxu0
  %v1562 = vadd.f32 0.0, %v1561
  %v1563 = vpop.f32.mrf.mxu0
  %1564 = vmatprep.mubr.f32.mxu0 0.0
  %1565 = vmatmul.mubr.f32.gmra.mxu0 %v1483
  %v1566 = vpop.f32.mrf.mxu0
  %v1567 = vadd.f32 0.0, %v1566
  %v1568 = vpop.f32.mrf.mxu0
  %1569 = vdwg.mxu0
  %v1571 = vsel %vm1472, %v1459, 0
  %1573 = vmatprep.subr.mxu0 0.0
  %1574 = vmatpush1.msra.mxu0 0.0
  %1575 = vmatprep.subr.mxu0 0.0
  %1576 = vmatpush1.msra.mxu0 0.0
  %1577 = vmatprep.subr.mxu0 0.0
  %1578 = vmatpush1.msra.mxu0 0.0
  %1579 = vmatprep.subr.mxu0 0.0
  %1580 = vmatpush1.msra.mxu0 0.0
  %1581 = vmatprep.subr.mxu0 0.0
  %1582 = vmatpush1.msra.mxu0 0.0
  %1583 = vmatprep.subr.mxu0 0.0
  %1584 = vmatpush1.msra.mxu0 0.0
  %1585 = vmatprep.subr.mxu0 0.0
  %1586 = vmatpush1.msra.mxu0 0.0
  %1587 = vmatprep.subr.mxu0 0.0
  %1588 = vmatpush1.msra.mxu0 0.0
  %1589 = vmatprep.subr.mxu0 0.0
  %1590 = vmatpush1.msra.mxu0 0.0
  %1591 = vmatprep.subr.mxu0 0.0
  %1592 = vmatpush1.msra.mxu0 0.0
  %1593 = vmatprep.subr.mxu0 0.0
  %1594 = vmatpush1.msra.mxu0 0.0
  %1595 = vmatprep.subr.mxu0 0.0
  %1596 = vmatpush1.msra.mxu0 0.0
  %1597 = vmatprep.subr.mxu0 0.0
  %1598 = vmatpush1.msra.mxu0 0.0
  %1599 = vmatprep.subr.mxu0 0.0
  %1600 = vmatpush1.msra.mxu0 0.0
  %1601 = vmatprep.subr.mxu0 0.0
  %1602 = vmatpush1.msra.mxu0 %v1468
  %1603 = vmatprep.subr.mxu0 0.0
  %1604 = vmatpush1.msra.mxu0 %v1467
  %1605 = vmatprep.subr.mxu0 0.0
  %1606 = vmatpush2.msra.mxu0 0.0
  %1607 = vmatprep.subr.mxu0 0.0
  %1608 = vmatpush2.msra.mxu0 0.0
  %1609 = vmatprep.subr.mxu0 0.0
  %1610 = vmatpush2.msra.mxu0 0.0
  %1611 = vmatprep.subr.mxu0 0.0
  %1612 = vmatpush2.msra.mxu0 0.0
  %1613 = vmatprep.subr.mxu0 0.0
  %1614 = vmatpush2.msra.mxu0 0.0
  %1615 = vmatprep.subr.mxu0 0.0
  %1616 = vmatpush2.msra.mxu0 0.0
  %1617 = vmatprep.subr.mxu0 0.0
  %1618 = vmatpush2.msra.mxu0 0.0
  %1619 = vmatprep.subr.mxu0 0.0
  %1620 = vmatpush2.msra.mxu0 0.0
  %1621 = vmatprep.subr.mxu0 0.0
  %1622 = vmatpush2.msra.mxu0 0.0
  %1623 = vmatprep.subr.mxu0 0.0
  %1624 = vmatpush2.msra.mxu0 0.0
  %1625 = vmatprep.subr.mxu0 0.0
  %1626 = vmatpush2.msra.mxu0 0.0
  %1627 = vmatprep.subr.mxu0 0.0
  %1628 = vmatpush2.msra.mxu0 0.0
  %1629 = vmatprep.subr.mxu0 0.0
  %1630 = vmatpush2.msra.mxu0 0.0
  %1631 = vmatprep.subr.mxu0 0.0
  %1632 = vmatpush2.msra.mxu0 0.0
  %1633 = vmatprep.subr.mxu0 0.0
  %1634 = vmatpush2.msra.mxu0 0.0
  %1635 = vmatprep.subr.mxu0 0.0
  %1636 = vmatpush2.msra.mxu0 0.0
  %1637 = vmatprep.mubr.f32.mxu0 0.0
  %1638 = vmatmul.mubr.f32.gmra.mxu0 %v1571
  %v1639 = vpop.f32.mrf.mxu0
  %v1640 = vadd.f32 %v1552, %v1639
  %v1641 = vpop.f32.mrf.mxu0
  %1642 = vmatprep.mubr.f32.mxu0 0.0
  %1643 = vmatmul.mubr.f32.gmra.mxu0 %v1474
  %v1644 = vpop.f32.mrf.mxu0
  %v1645 = vadd.f32 %v1557, %v1644
  %v1646 = vpop.f32.mrf.mxu0
  %1647 = vmatprep.mubr.f32.mxu0 0.0
  %1648 = vmatmul.mubr.f32.gmra.mxu0 %v1477
  %v1649 = vpop.f32.mrf.mxu0
  %v1650 = vadd.f32 %v1562, %v1649
  %v1651 = vpop.f32.mrf.mxu0
  %1652 = vmatprep.mubr.f32.mxu0 0.0
  %1653 = vmatmul.mubr.f32.gmra.mxu0 %v1480
  %v1654 = vpop.f32.mrf.mxu0
  %v1655 = vadd.f32 %v1567, %v1654
  %v1656 = vpop.f32.mrf.mxu0
  %1657 = vdwg.mxu0
  %s1658 = scalar_lea.vmem %s5, 32
  %v1659 = vld [vmem:[%s1658] sm:$0xff]
  %v1660 = vld [vmem:[%s1658 + $0x8] sm:$0xff]
  %v1662 = vsel %vm1472, %v1464, 0
  %1664 = vmatprep.subr.mxu0 0.0
  %1665 = vmatpush1.msra.mxu0 0.0
  %1666 = vmatprep.subr.mxu0 0.0
  %1667 = vmatpush1.msra.mxu0 0.0
  %1668 = vmatprep.subr.mxu0 0.0
  %1669 = vmatpush1.msra.mxu0 0.0
  %1670 = vmatprep.subr.mxu0 0.0
  %1671 = vmatpush1.msra.mxu0 0.0
  %1672 = vmatprep.subr.mxu0 0.0
  %1673 = vmatpush1.msra.mxu0 0.0
  %1674 = vmatprep.subr.mxu0 0.0
  %1675 = vmatpush1.msra.mxu0 0.0
  %1676 = vmatprep.subr.mxu0 0.0
  %1677 = vmatpush1.msra.mxu0 0.0
  %1678 = vmatprep.subr.mxu0 0.0
  %1679 = vmatpush1.msra.mxu0 0.0
  %1680 = vmatprep.subr.mxu0 0.0
  %1681 = vmatpush1.msra.mxu0 0.0
  %1682 = vmatprep.subr.mxu0 0.0
  %1683 = vmatpush1.msra.mxu0 0.0
  %1684 = vmatprep.subr.mxu0 0.0
  %1685 = vmatpush1.msra.mxu0 0.0
  %1686 = vmatprep.subr.mxu0 0.0
  %1687 = vmatpush1.msra.mxu0 0.0
  %1688 = vmatprep.subr.mxu0 0.0
  %1689 = vmatpush1.msra.mxu0 0.0
  %1690 = vmatprep.subr.mxu0 0.0
  %1691 = vmatpush1.msra.mxu0 0.0
  %1692 = vmatprep.subr.mxu0 0.0
  %1693 = vmatpush1.msra.mxu0 %v1660
  %1694 = vmatprep.subr.mxu0 0.0
  %1695 = vmatpush1.msra.mxu0 %v1659
  %1696 = vmatprep.subr.mxu0 0.0
  %1697 = vmatpush2.msra.mxu0 0.0
  %1698 = vmatprep.subr.mxu0 0.0
  %1699 = vmatpush2.msra.mxu0 0.0
  %1700 = vmatprep.subr.mxu0 0.0
  %1701 = vmatpush2.msra.mxu0 0.0
  %1702 = vmatprep.subr.mxu0 0.0
  %1703 = vmatpush2.msra.mxu0 0.0
  %1704 = vmatprep.subr.mxu0 0.0
  %1705 = vmatpush2.msra.mxu0 0.0
  %1706 = vmatprep.subr.mxu0 0.0
  %1707 = vmatpush2.msra.mxu0 0.0
  %1708 = vmatprep.subr.mxu0 0.0
  %1709 = vmatpush2.msra.mxu0 0.0
  %1710 = vmatprep.subr.mxu0 0.0
  %1711 = vmatpush2.msra.mxu0 0.0
  %1712 = vmatprep.subr.mxu0 0.0
  %1713 = vmatpush2.msra.mxu0 0.0
  %1714 = vmatprep.subr.mxu0 0.0
  %1715 = vmatpush2.msra.mxu0 0.0
  %1716 = vmatprep.subr.mxu0 0.0
  %1717 = vmatpush2.msra.mxu0 0.0
  %1718 = vmatprep.subr.mxu0 0.0
  %1719 = vmatpush2.msra.mxu0 0.0
  %1720 = vmatprep.subr.mxu0 0.0
  %1721 = vmatpush2.msra.mxu0 0.0
  %1722 = vmatprep.subr.mxu0 0.0
  %1723 = vmatpush2.msra.mxu0 0.0
  %1724 = vmatprep.subr.mxu0 0.0
  %1725 = vmatpush2.msra.mxu0 0.0
  %1726 = vmatprep.subr.mxu0 0.0
  %1727 = vmatpush2.msra.mxu0 0.0
  %1728 = vmatprep.mubr.f32.mxu0 0.0
  %1729 = vmatmul.mubr.f32.gmra.mxu0 %v1477
  %v1730 = vpop.f32.mrf.mxu0
  %v1731 = vadd.f32 0.0, %v1730
  %v1732 = vpop.f32.mrf.mxu0
  %1733 = vmatprep.mubr.f32.mxu0 0.0
  %1734 = vmatmul.mubr.f32.gmra.mxu0 %v1480
  %v1735 = vpop.f32.mrf.mxu0
  %v1736 = vadd.f32 0.0, %v1735
  %v1737 = vpop.f32.mrf.mxu0
  %1738 = vmatprep.mubr.f32.mxu0 0.0
  %1739 = vmatmul.mubr.f32.gmra.mxu0 %v1483
  %v1740 = vpop.f32.mrf.mxu0
  %v1741 = vadd.f32 0.0, %v1740
  %v1742 = vpop.f32.mrf.mxu0
  %1743 = vmatprep.mubr.f32.mxu0 0.0
  %1744 = vmatmul.mubr.f32.gmra.mxu0 %v1662
  %v1745 = vpop.f32.mrf.mxu0
  %v1746 = vadd.f32 0.0, %v1745
  %v1747 = vpop.f32.mrf.mxu0
  %1748 = vdwg.mxu0
  %v1749 = vadd.f32 %v1640, %v1731
  %v1750 = vadd.f32 %v1645, %v1736
  %v1751 = vadd.f32 %v1650, %v1741
  %v1752 = vadd.f32 %v1655, %v1746
  %s1753 = scalar_lea.vmem %s5, 48
  %v1754 = vld [vmem:[%s1753] sm:$0xff]
  %v1755 = vld [vmem:[%s1753 + $0x8] sm:$0xff]
  %v1757 = vsel %vm1472, %v1465, 0
  %1759 = vmatprep.subr.mxu0 0.0
  %1760 = vmatpush1.msra.mxu0 0.0
  %1761 = vmatprep.subr.mxu0 0.0
  %1762 = vmatpush1.msra.mxu0 0.0
  %1763 = vmatprep.subr.mxu0 0.0
  %1764 = vmatpush1.msra.mxu0 0.0
  %1765 = vmatprep.subr.mxu0 0.0
  %1766 = vmatpush1.msra.mxu0 0.0
  %1767 = vmatprep.subr.mxu0 0.0
  %1768 = vmatpush1.msra.mxu0 0.0
  %1769 = vmatprep.subr.mxu0 0.0
  %1770 = vmatpush1.msra.mxu0 0.0
  %1771 = vmatprep.subr.mxu0 0.0
  %1772 = vmatpush1.msra.mxu0 0.0
  %1773 = vmatprep.subr.mxu0 0.0
  %1774 = vmatpush1.msra.mxu0 0.0
  %1775 = vmatprep.subr.mxu0 0.0
  %1776 = vmatpush1.msra.mxu0 0.0
  %1777 = vmatprep.subr.mxu0 0.0
  %1778 = vmatpush1.msra.mxu0 0.0
  %1779 = vmatprep.subr.mxu0 0.0
  %1780 = vmatpush1.msra.mxu0 0.0
  %1781 = vmatprep.subr.mxu0 0.0
  %1782 = vmatpush1.msra.mxu0 0.0
  %1783 = vmatprep.subr.mxu0 0.0
  %1784 = vmatpush1.msra.mxu0 0.0
  %1785 = vmatprep.subr.mxu0 0.0
  %1786 = vmatpush1.msra.mxu0 0.0
  %1787 = vmatprep.subr.mxu0 0.0
  %1788 = vmatpush1.msra.mxu0 %v1755
  %1789 = vmatprep.subr.mxu0 0.0
  %1790 = vmatpush1.msra.mxu0 %v1754
  %1791 = vmatprep.subr.mxu0 0.0
  %1792 = vmatpush2.msra.mxu0 0.0
  %1793 = vmatprep.subr.mxu0 0.0
  %1794 = vmatpush2.msra.mxu0 0.0
  %1795 = vmatprep.subr.mxu0 0.0
  %1796 = vmatpush2.msra.mxu0 0.0
  %1797 = vmatprep.subr.mxu0 0.0
  %1798 = vmatpush2.msra.mxu0 0.0
  %1799 = vmatprep.subr.mxu0 0.0
  %1800 = vmatpush2.msra.mxu0 0.0
  %1801 = vmatprep.subr.mxu0 0.0
  %1802 = vmatpush2.msra.mxu0 0.0
  %1803 = vmatprep.subr.mxu0 0.0
  %1804 = vmatpush2.msra.mxu0 0.0
  %1805 = vmatprep.subr.mxu0 0.0
  %1806 = vmatpush2.msra.mxu0 0.0
  %1807 = vmatprep.subr.mxu0 0.0
  %1808 = vmatpush2.msra.mxu0 0.0
  %1809 = vmatprep.subr.mxu0 0.0
  %1810 = vmatpush2.msra.mxu0 0.0
  %1811 = vmatprep.subr.mxu0 0.0
  %1812 = vmatpush2.msra.mxu0 0.0
  %1813 = vmatprep.subr.mxu0 0.0
  %1814 = vmatpush2.msra.mxu0 0.0
  %1815 = vmatprep.subr.mxu0 0.0
  %1816 = vmatpush2.msra.mxu0 0.0
  %1817 = vmatprep.subr.mxu0 0.0
  %1818 = vmatpush2.msra.mxu0 0.0
  %1819 = vmatprep.subr.mxu0 0.0
  %1820 = vmatpush2.msra.mxu0 0.0
  %1821 = vmatprep.subr.mxu0 0.0
  %1822 = vmatpush2.msra.mxu0 0.0
  %1823 = vmatprep.mubr.f32.mxu0 0.0
  %1824 = vmatmul.mubr.f32.gmra.mxu0 %v1480
  %v1825 = vpop.f32.mrf.mxu0
  %v1826 = vadd.f32 0.0, %v1825
  %v1827 = vpop.f32.mrf.mxu0
  %1828 = vmatprep.mubr.f32.mxu0 0.0
  %1829 = vmatmul.mubr.f32.gmra.mxu0 %v1483
  %v1830 = vpop.f32.mrf.mxu0
  %v1831 = vadd.f32 0.0, %v1830
  %v1832 = vpop.f32.mrf.mxu0
  %1833 = vmatprep.mubr.f32.mxu0 0.0
  %1834 = vmatmul.mubr.f32.gmra.mxu0 %v1662
  %v1835 = vpop.f32.mrf.mxu0
  %v1836 = vadd.f32 0.0, %v1835
  %v1837 = vpop.f32.mrf.mxu0
  %1838 = vmatprep.mubr.f32.mxu0 0.0
  %1839 = vmatmul.mubr.f32.gmra.mxu0 %v1757
  %v1840 = vpop.f32.mrf.mxu0
  %v1841 = vadd.f32 0.0, %v1840
  %v1842 = vpop.f32.mrf.mxu0
  %1843 = vdwg.mxu0
  %v1844 = vadd.f32 %v1749, %v1826
  %v1845 = vadd.f32 %v1750, %v1831
  %v1846 = vadd.f32 %v1751, %v1836
  %v1847 = vadd.f32 %v1752, %v1841
  %s1848 = scalar_lea.vmem %s5, 64
  %v1849 = vld [vmem:[%s1848] sm:$0xff]
  %v1850 = vld [vmem:[%s1848 + $0x8] sm:$0xff]
  %v1852 = vsel %vm1472, %v1466, 0
  %1854 = vmatprep.subr.mxu0 0.0
  %1855 = vmatpush1.msra.mxu0 0.0
  %1856 = vmatprep.subr.mxu0 0.0
  %1857 = vmatpush1.msra.mxu0 0.0
  %1858 = vmatprep.subr.mxu0 0.0
  %1859 = vmatpush1.msra.mxu0 0.0
  %1860 = vmatprep.subr.mxu0 0.0
  %1861 = vmatpush1.msra.mxu0 0.0
  %1862 = vmatprep.subr.mxu0 0.0
  %1863 = vmatpush1.msra.mxu0 0.0
  %1864 = vmatprep.subr.mxu0 0.0
  %1865 = vmatpush1.msra.mxu0 0.0
  %1866 = vmatprep.subr.mxu0 0.0
  %1867 = vmatpush1.msra.mxu0 0.0
  %1868 = vmatprep.subr.mxu0 0.0
  %1869 = vmatpush1.msra.mxu0 0.0
  %1870 = vmatprep.subr.mxu0 0.0
  %1871 = vmatpush1.msra.mxu0 0.0
  %1872 = vmatprep.subr.mxu0 0.0
  %1873 = vmatpush1.msra.mxu0 0.0
  %1874 = vmatprep.subr.mxu0 0.0
  %1875 = vmatpush1.msra.mxu0 0.0
  %1876 = vmatprep.subr.mxu0 0.0
  %1877 = vmatpush1.msra.mxu0 0.0
  %1878 = vmatprep.subr.mxu0 0.0
  %1879 = vmatpush1.msra.mxu0 0.0
  %1880 = vmatprep.subr.mxu0 0.0
  %1881 = vmatpush1.msra.mxu0 0.0
  %1882 = vmatprep.subr.mxu0 0.0
  %1883 = vmatpush1.msra.mxu0 %v1850
  %1884 = vmatprep.subr.mxu0 0.0
  %1885 = vmatpush1.msra.mxu0 %v1849
  %1886 = vmatprep.subr.mxu0 0.0
  %1887 = vmatpush2.msra.mxu0 0.0
  %1888 = vmatprep.subr.mxu0 0.0
  %1889 = vmatpush2.msra.mxu0 0.0
  %1890 = vmatprep.subr.mxu0 0.0
  %1891 = vmatpush2.msra.mxu0 0.0
  %1892 = vmatprep.subr.mxu0 0.0
  %1893 = vmatpush2.msra.mxu0 0.0
  %1894 = vmatprep.subr.mxu0 0.0
  %1895 = vmatpush2.msra.mxu0 0.0
  %1896 = vmatprep.subr.mxu0 0.0
  %1897 = vmatpush2.msra.mxu0 0.0
  %1898 = vmatprep.subr.mxu0 0.0
  %1899 = vmatpush2.msra.mxu0 0.0
  %1900 = vmatprep.subr.mxu0 0.0
  %1901 = vmatpush2.msra.mxu0 0.0
  %1902 = vmatprep.subr.mxu0 0.0
  %1903 = vmatpush2.msra.mxu0 0.0
  %1904 = vmatprep.subr.mxu0 0.0
  %1905 = vmatpush2.msra.mxu0 0.0
  %1906 = vmatprep.subr.mxu0 0.0
  %1907 = vmatpush2.msra.mxu0 0.0
  %1908 = vmatprep.subr.mxu0 0.0
  %1909 = vmatpush2.msra.mxu0 0.0
  %1910 = vmatprep.subr.mxu0 0.0
  %1911 = vmatpush2.msra.mxu0 0.0
  %1912 = vmatprep.subr.mxu0 0.0
  %1913 = vmatpush2.msra.mxu0 0.0
  %1914 = vmatprep.subr.mxu0 0.0
  %1915 = vmatpush2.msra.mxu0 0.0
  %1916 = vmatprep.subr.mxu0 0.0
  %1917 = vmatpush2.msra.mxu0 0.0
  %1918 = vmatprep.mubr.f32.mxu0 0.0
  %1919 = vmatmul.mubr.f32.gmra.mxu0 %v1483
  %v1920 = vpop.f32.mrf.mxu0
  %v1921 = vadd.f32 0.0, %v1920
  %v1922 = vpop.f32.mrf.mxu0
  %1923 = vmatprep.mubr.f32.mxu0 0.0
  %1924 = vmatmul.mubr.f32.gmra.mxu0 %v1662
  %v1925 = vpop.f32.mrf.mxu0
  %v1926 = vadd.f32 0.0, %v1925
  %v1927 = vpop.f32.mrf.mxu0
  %1928 = vmatprep.mubr.f32.mxu0 0.0
  %1929 = vmatmul.mubr.f32.gmra.mxu0 %v1757
  %v1930 = vpop.f32.mrf.mxu0
  %v1931 = vadd.f32 0.0, %v1930
  %v1932 = vpop.f32.mrf.mxu0
  %1933 = vmatprep.mubr.f32.mxu0 0.0
  %1934 = vmatmul.mubr.f32.gmra.mxu0 %v1852
  %v1935 = vpop.f32.mrf.mxu0
  %v1936 = vadd.f32 0.0, %v1935
  %v1937 = vpop.f32.mrf.mxu0
  %1938 = vdwg.mxu0
  %v1939 = vadd.f32 %v1844, %v1921
  %v1940 = vadd.f32 %v1845, %v1926
  %v1941 = vadd.f32 %v1846, %v1931
  %v1942 = vadd.f32 %v1847, %v1936
  %v1943 = vld [vmem:[%s6] sm:$0x1]
  %v1945 = vlaneseq
  %v1946 = vshrl.u32 %v1945, 7
  %v1947 = vsub.s32 0, %v1946
  %v1948 = vrot.slane %v1943, %v1947
  %v1950 = vadd.f32 %v1939, %v1948
  %v1951 = vadd.f32 %v1940, %v1948
  %v1952 = vadd.f32 %v1941, %v1948
  %v1953 = vadd.f32 %v1942, %v1948
  %v1954 = vmax.f32 %v1950, 0.0
  %v1955 = vmax.f32 %v1951, 0.0
  %v1956 = vmax.f32 %v1952, 0.0
  %v1957 = vmax.f32 %v1953, 0.0
  %vm1958 = vcmask 31744
  %1959 = vst.msk [vmem:[#allocation2] sm:$0xff] %vm1958, %v1954
  %1961 = vrot.lane.b32.xlu0 %v1955, 4
  %v1962 = vpop.permute.xlu0 %1961
  %vm1964 = vcmask 64544
  %1965 = vst.msk [vmem:[#allocation2] sm:$0xff] %vm1964, %v1962
  %1967 = vrot.lane.b32.xlu0 %v1956, 8
  %v1968 = vpop.permute.xlu0 %1967
  %vm1970 = vcmask 97344
  %1971 = vst.msk [vmem:[#allocation2] sm:$0xff] %vm1970, %v1968
  %1973 = vrot.lane.b32.xlu0 %v1957, 12
  %v1974 = vpop.permute.xlu0 %1973
  %vm1976 = vcmask 130144
  %1977 = vst.msk [vmem:[#allocation2] sm:$0xff] %vm1976, %v1974
  %1979 = vrot.lane.b32.xlu0 %v1954, 12
  %v1980 = vpop.permute.xlu0 %1979
  %vm1982 = vcmask 162944
  %1983 = vst.msk [vmem:[#allocation2] sm:$0xff] %vm1982, %v1980
  %1984 = vrot.lane.b32.xlu0 %v1955, 16
  %v1985 = vpop.permute.xlu0 %1984
  %vm1987 = vcmask 195744
  %1988 = vst.msk [vmem:[#allocation2] sm:$0xff] %vm1987, %v1985
  %1989 = vrot.lane.b32.xlu0 %v1956, 20
  %v1990 = vpop.permute.xlu0 %1989
  %vm1992 = vcmask 228544
  %1993 = vst.msk [vmem:[#allocation2] sm:$0xff] %vm1992, %v1990
  %1994 = vrot.lane.b32.xlu0 %v1957, 24
  %v1995 = vpop.permute.xlu0 %1994
  %vm1997 = vcmask 261344
  %1998 = vst.msk [vmem:[#allocation2] sm:$0xff] %vm1997, %v1995
  %v1999 = vld [vmem:[#allocation2] sm:$0xff]
  %v2000 = vld [vmem:[%s7] sm:$0xff]
  %v2001 = vld [vmem:[%s7 + $0x8] sm:$0xff]
  %v2002 = vld [vmem:[%s7 + $0x10] sm:$0xff]
  %v2003 = vld [vmem:[%s7 + $0x18] sm:$0xff]
  %v2004 = vld [vmem:[%s8] sm:$0x1]
  %v2006 = vlaneseq
  %v2007 = vshrl.u32 %v2006, 7
  %v2008 = vsub.s32 0, %v2007
  %v2009 = vrot.slane %v2004, %v2008
  %vm2011 = vcmask 261120
  %v2013 = vsel %vm2011, %v1999, 0
  %2015 = vmatprep.subr.mxu0 0.0
  %2016 = vmatpush1.msra.mxu0 0.0
  %2017 = vmatprep.subr.mxu0 0.0
  %2018 = vmatpush1.msra.mxu0 0.0
  %2019 = vmatprep.subr.mxu0 0.0
  %2020 = vmatpush1.msra.mxu0 0.0
  %2021 = vmatprep.subr.mxu0 0.0
  %2022 = vmatpush1.msra.mxu0 0.0
  %2023 = vmatprep.subr.mxu0 0.0
  %2024 = vmatpush1.msra.mxu0 0.0
  %2025 = vmatprep.subr.mxu0 0.0
  %2026 = vmatpush1.msra.mxu0 0.0
  %2027 = vmatprep.subr.mxu0 0.0
  %2028 = vmatpush1.msra.mxu0 0.0
  %2029 = vmatprep.subr.mxu0 0.0
  %2030 = vmatpush1.msra.mxu0 0.0
  %2031 = vmatprep.subr.mxu0 0.0
  %2032 = vmatpush1.msra.mxu0 0.0
  %2033 = vmatprep.subr.mxu0 0.0
  %2034 = vmatpush1.msra.mxu0 0.0
  %2035 = vmatprep.subr.mxu0 0.0
  %2036 = vmatpush1.msra.mxu0 0.0
  %2037 = vmatprep.subr.mxu0 0.0
  %2038 = vmatpush1.msra.mxu0 0.0
  %2039 = vmatprep.subr.mxu0 0.0
  %2040 = vmatpush1.msra.mxu0 %v2003
  %2041 = vmatprep.subr.mxu0 0.0
  %2042 = vmatpush1.msra.mxu0 %v2002
  %2043 = vmatprep.subr.mxu0 0.0
  %2044 = vmatpush1.msra.mxu0 %v2001
  %2045 = vmatprep.subr.mxu0 0.0
  %2046 = vmatpush1.msra.mxu0 %v2000
  %2047 = vmatprep.subr.mxu0 0.0
  %2048 = vmatpush2.msra.mxu0 0.0
  %2049 = vmatprep.subr.mxu0 0.0
  %2050 = vmatpush2.msra.mxu0 0.0
  %2051 = vmatprep.subr.mxu0 0.0
  %2052 = vmatpush2.msra.mxu0 0.0
  %2053 = vmatprep.subr.mxu0 0.0
  %2054 = vmatpush2.msra.mxu0 0.0
  %2055 = vmatprep.subr.mxu0 0.0
  %2056 = vmatpush2.msra.mxu0 0.0
  %2057 = vmatprep.subr.mxu0 0.0
  %2058 = vmatpush2.msra.mxu0 0.0
  %2059 = vmatprep.subr.mxu0 0.0
  %2060 = vmatpush2.msra.mxu0 0.0
  %2061 = vmatprep.subr.mxu0 0.0
  %2062 = vmatpush2.msra.mxu0 0.0
  %2063 = vmatprep.subr.mxu0 0.0
  %2064 = vmatpush2.msra.mxu0 0.0
  %2065 = vmatprep.subr.mxu0 0.0
  %2066 = vmatpush2.msra.mxu0 0.0
  %2067 = vmatprep.subr.mxu0 0.0
  %2068 = vmatpush2.msra.mxu0 0.0
  %2069 = vmatprep.subr.mxu0 0.0
  %2070 = vmatpush2.msra.mxu0 0.0
  %2071 = vmatprep.subr.mxu0 0.0
  %2072 = vmatpush2.msra.mxu0 0.0
  %2073 = vmatprep.subr.mxu0 0.0
  %2074 = vmatpush2.msra.mxu0 0.0
  %2075 = vmatprep.subr.mxu0 0.0
  %2076 = vmatpush2.msra.mxu0 0.0
  %2077 = vmatprep.subr.mxu0 0.0
  %2078 = vmatpush2.msra.mxu0 0.0
  %2079 = vmatprep.mubr.f32.mxu0 0.0
  %2080 = vmatmul.mubr.f32.gmra.mxu0 %v2013
  %v2081 = vpop.f32.mrf.mxu0
  %v2082 = vadd.f32 %v2009, %v2081
  %v2083 = vpop.f32.mrf.mxu0
  %2084 = vdwg.mxu0
  %v2085 = vmax.f32 %v2082, 0.0
  %v2086 = vld [vmem:[%s9] sm:$0xff]
  %v2087 = vld [vmem:[%s9 + $0x8] sm:$0xff]
  %v2088 = vld [vmem:[%s9 + $0x10] sm:$0xff]
  %v2089 = vld [vmem:[%s9 + $0x18] sm:$0xff]
  %v2090 = vld [vmem:[%s10] sm:$0x1]
  %v2092 = vlaneseq
  %v2093 = vshrl.u32 %v2092, 7
  %v2094 = vsub.s32 0, %v2093
  %v2095 = vrot.slane %v2090, %v2094
  %v2098 = vsel %vm2011, %v2085, 0
  %2100 = vmatprep.subr.mxu0 0.0
  %2101 = vmatpush1.msra.mxu0 0.0
  %2102 = vmatprep.subr.mxu0 0.0
  %2103 = vmatpush1.msra.mxu0 0.0
  %2104 = vmatprep.subr.mxu0 0.0
  %2105 = vmatpush1.msra.mxu0 0.0
  %2106 = vmatprep.subr.mxu0 0.0
  %2107 = vmatpush1.msra.mxu0 0.0
  %2108 = vmatprep.subr.mxu0 0.0
  %2109 = vmatpush1.msra.mxu0 0.0
  %2110 = vmatprep.subr.mxu0 0.0
  %2111 = vmatpush1.msra.mxu0 0.0
  %2112 = vmatprep.subr.mxu0 0.0
  %2113 = vmatpush1.msra.mxu0 0.0
  %2114 = vmatprep.subr.mxu0 0.0
  %2115 = vmatpush1.msra.mxu0 0.0
  %2116 = vmatprep.subr.mxu0 0.0
  %2117 = vmatpush1.msra.mxu0 0.0
  %2118 = vmatprep.subr.mxu0 0.0
  %2119 = vmatpush1.msra.mxu0 0.0
  %2120 = vmatprep.subr.mxu0 0.0
  %2121 = vmatpush1.msra.mxu0 0.0
  %2122 = vmatprep.subr.mxu0 0.0
  %2123 = vmatpush1.msra.mxu0 0.0
  %2124 = vmatprep.subr.mxu0 0.0
  %2125 = vmatpush1.msra.mxu0 %v2089
  %2126 = vmatprep.subr.mxu0 0.0
  %2127 = vmatpush1.msra.mxu0 %v2088
  %2128 = vmatprep.subr.mxu0 0.0
  %2129 = vmatpush1.msra.mxu0 %v2087
  %2130 = vmatprep.subr.mxu0 0.0
  %2131 = vmatpush1.msra.mxu0 %v2086
  %2132 = vmatprep.subr.mxu0 0.0
  %2133 = vmatpush2.msra.mxu0 0.0
  %2134 = vmatprep.subr.mxu0 0.0
  %2135 = vmatpush2.msra.mxu0 0.0
  %2136 = vmatprep.subr.mxu0 0.0
  %2137 = vmatpush2.msra.mxu0 0.0
  %2138 = vmatprep.subr.mxu0 0.0
  %2139 = vmatpush2.msra.mxu0 0.0
  %2140 = vmatprep.subr.mxu0 0.0
  %2141 = vmatpush2.msra.mxu0 0.0
  %2142 = vmatprep.subr.mxu0 0.0
  %2143 = vmatpush2.msra.mxu0 0.0
  %2144 = vmatprep.subr.mxu0 0.0
  %2145 = vmatpush2.msra.mxu0 0.0
  %2146 = vmatprep.subr.mxu0 0.0
  %2147 = vmatpush2.msra.mxu0 0.0
  %2148 = vmatprep.subr.mxu0 0.0
  %2149 = vmatpush2.msra.mxu0 0.0
  %2150 = vmatprep.subr.mxu0 0.0
  %2151 = vmatpush2.msra.mxu0 0.0
  %2152 = vmatprep.subr.mxu0 0.0
  %2153 = vmatpush2.msra.mxu0 0.0
  %2154 = vmatprep.subr.mxu0 0.0
  %2155 = vmatpush2.msra.mxu0 0.0
  %2156 = vmatprep.subr.mxu0 0.0
  %2157 = vmatpush2.msra.mxu0 0.0
  %2158 = vmatprep.subr.mxu0 0.0
  %2159 = vmatpush2.msra.mxu0 0.0
  %2160 = vmatprep.subr.mxu0 0.0
  %2161 = vmatpush2.msra.mxu0 0.0
  %2162 = vmatprep.subr.mxu0 0.0
  %2163 = vmatpush2.msra.mxu0 0.0
  %2164 = vmatprep.mubr.f32.mxu0 0.0
  %2165 = vmatmul.mubr.f32.gmra.mxu0 %v2098
  %v2166 = vpop.f32.mrf.mxu0
  %v2167 = vadd.f32 %v2095, %v2166
  %v2168 = vpop.f32.mrf.mxu0
  %2169 = vdwg.mxu0
  %2170 = vst [vmem:[%s11] sm:$0xff] %v2167
  // Predicated region
  $region46: #{forward.1} parent=0 // pred_check
    _
  $region47: #{forward.1} parent=0 // pred_check_branch
    %2172 = sbr.rel (0) target = $region49
  $region48: #{forward.1} parent=0 // pred_region
    _
  $region49: #{forward.1} parent=0 // pred_fallthru
    _
  // Predicated region
  $region50: #{forward.1} parent=0 // pred_check
    _
  $region51: #{forward.1} parent=0 // pred_check_branch
    %2174 = sbr.rel (0) target = $region53
  $region52: #{forward.1} parent=0 // pred_region
    _
  $region53: #{forward.1} parent=0 // pred_fallthru
    _

</llo_original>
